<compile_context>
chip_gen: v6e
topology: v6e:2x2x1
jax: 0.10.0
libtpu: 0.0.40
codegen_flags: <defaults>
</compile_context>

<pallas_src>
import functools

import jax
import jax.numpy as jnp
from jax.experimental import pallas as pl
from jax.experimental.pallas import tpu as pltpu

IN_FEATURES = 784
OUT_FEATURES = 10
MAX_TILE_B = 1024    # batch tile (rows) for large batches (fits v5e 16 MiB scoped VMEM)


def _fc1_kernel(x_ref, w_ref, b_ref, o_ref):
    # x_ref: (tile_b, 784)  w_ref: (784, 10)  b_ref: (1, 10)  o_ref: (tile_b, 10)
    acc = jnp.dot(
        x_ref[...], w_ref[...],
        preferred_element_type=jnp.float32,
        precision=jax.lax.Precision.HIGHEST,   # f32 parity; free (HBM-bound kernel)
    )
    o_ref[...] = (acc + b_ref[...]).astype(o_ref.dtype)


def _round_up(n, m):
    return ((n + m - 1) // m) * m


@functools.partial(jax.jit, static_argnames=())
def fnn1_forward(x_nchw, w, b):
    """Forward pass of FNN_1.

    Args:
      x_nchw: (B, 1, 28, 28) float32 input (NCHW, like PyTorch).
      w:      (784, 10) float32 weight (transposed vs. torch Linear).
      b:      (10,)     float32 bias.

    Returns:
      (logits, logits) with logits of shape (B, 10) — matches `return (x, x)`.
    """
    B = x_nchw.shape[0]
    x_flat = x_nchw.reshape(B, IN_FEATURES)       # same as torch .view(-1, 784)
    b2 = b.reshape(1, OUT_FEATURES)

    # Batch tile: aim for >=2 grid steps (both v7x TensorCores busy) when possible,
    # capped at MAX_TILE_B, rounded up to the f32 sublane multiple of 8.
    tile_b = min(MAX_TILE_B, _round_up(pl.cdiv(B, 2), 8))
    grid = (pl.cdiv(B, tile_b),)

    logits = pl.pallas_call(
        _fc1_kernel,
        out_shape=jax.ShapeDtypeStruct((B, OUT_FEATURES), jnp.float32),
        grid_spec=pltpu.PrefetchScalarGridSpec(
            num_scalar_prefetch=0,
            grid=grid,
            in_specs=[
                pl.BlockSpec((tile_b, IN_FEATURES), lambda i: (i, 0)),      # x: tiled over batch
                pl.BlockSpec((IN_FEATURES, OUT_FEATURES), lambda i: (0, 0)),  # W: resident
                pl.BlockSpec((1, OUT_FEATURES), lambda i: (0, 0)),            # b: resident
            ],
            out_specs=pl.BlockSpec((tile_b, OUT_FEATURES), lambda i: (i, 0)),
        ),
        compiler_params=pltpu.CompilerParams(
            dimension_semantics=("parallel",),   # shard batch tiles across TCs (v7x)
        ),
        cost_estimate=pl.CostEstimate(
            flops=2 * B * IN_FEATURES * OUT_FEATURES,
            transcendentals=0,
            bytes_accessed=(B * IN_FEATURES * 4
                            + IN_FEATURES * OUT_FEATURES * 4
                            + OUT_FEATURES * 4
                            + B * OUT_FEATURES * 4),
        ),
    )(x_flat, w, b2)

    return logits, logits


def init_params(key):
    """Deterministic init mirroring nn.Linear(784, 10) shapes.

    PyTorch uses U(-1/sqrt(fan_in), 1/sqrt(fan_in)); we reproduce that
    distribution deterministically with a fixed JAX key.
    """
    kw, kb = jax.random.split(key)
    bound = 1.0 / jnp.sqrt(float(IN_FEATURES))
    # Stored as (784, 10) = transpose of torch's (10, 784) weight.
    w = jax.random.uniform(kw, (IN_FEATURES, OUT_FEATURES), jnp.float32, -bound, bound)
    b = jax.random.uniform(kb, (OUT_FEATURES,), jnp.float32, -bound, bound)
    return w, b


if __name__ == "__main__":
    key = jax.random.PRNGKey(0)
    kx, kp = jax.random.split(key)

    B = 2
    x = jax.random.normal(kx, (B, 1, 28, 28), jnp.float32)  # NCHW, like MNIST
    w, b = init_params(kp)

    out1, out2 = fnn1_forward(x, w, b)
    jax.block_until_ready((out1, out2))

    # Sanity check against plain JAX reference (same f32-highest precision).
    ref = jnp.dot(x.reshape(B, IN_FEATURES), w,
                  precision=jax.lax.Precision.HIGHEST) + b
    assert out1.shape == (B, OUT_FEATURES) and out2.shape == (B, OUT_FEATURES)
    assert jnp.allclose(out1, ref, atol=1e-5), "mismatch vs reference"
    assert jnp.array_equal(out1, out2), "tuple outputs must be identical"

    print("KERNEL_OK")
</pallas_src>

<mosaic_0001>
module attributes {stable_mosaic.version = 11 : i64} {
  func.func @_fc1_kernel(%arg0: i32, %arg1: memref<8x784xf32, #tpu.memory_space<vmem>>, %arg2: memref<784x10xf32, #tpu.memory_space<vmem>>, %arg3: memref<1x10xf32, #tpu.memory_space<vmem>>, %arg4: memref<8x10xf32, #tpu.memory_space<vmem>>) attributes {dimension_semantics = [#tpu.dimension_semantics<parallel>], iteration_bounds = array<i64: 1>, scalar_prefetch = 0 : i64, scratch_operands = 0 : i64, tpu.core_type = #tpu.core_type<tc>, window_params = [{transform_indices = @transform_0, window_bounds = array<i64: 8, 784>}, {pipeline_mode = #tpu.pipeline_mode<synchronous>, transform_indices = @transform_1, window_bounds = array<i64: 784, 10>}, {pipeline_mode = #tpu.pipeline_mode<synchronous>, transform_indices = @transform_2, window_bounds = array<i64: 1, 10>}, {transform_indices = @transform_3, window_bounds = array<i64: 8, 10>}]} {
    %c0 = arith.constant 0 : index
    %c0_0 = arith.constant 0 : index
    %0 = vector.load %arg1[%c0, %c0_0] : memref<8x784xf32, #tpu.memory_space<vmem>>, vector<8x784xf32>
    %c0_1 = arith.constant 0 : index
    %c0_2 = arith.constant 0 : index
    %1 = vector.load %arg2[%c0_1, %c0_2] : memref<784x10xf32, #tpu.memory_space<vmem>>, vector<784x10xf32>
    %cst = arith.constant dense<0.000000e+00> : vector<8x10xf32>
    %2 = tpu.matmul %0, %1, %cst {dimension_numbers = #tpu.dot_dimension_numbers<[1], [0], [0], [1], [0, 0, 1, 1], [], []>, precision = #tpu.contract_precision<fp32>} : vector<8x784xf32>, vector<784x10xf32>, vector<8x10xf32> -> vector<8x10xf32>
    %c0_3 = arith.constant 0 : index
    %c0_4 = arith.constant 0 : index
    %3 = vector.load %arg3[%c0_3, %c0_4] : memref<1x10xf32, #tpu.memory_space<vmem>>, vector<1x10xf32>
    %4 = vector.broadcast %3 : vector<1x10xf32> to vector<8x10xf32>
    %5 = arith.addf %2, %4 : vector<8x10xf32>
    %c0_5 = arith.constant 0 : index
    %c0_6 = arith.constant 0 : index
    %6 = vector.load %arg4[%c0_5, %c0_6] : memref<8x10xf32, #tpu.memory_space<vmem>>, vector<8x10xf32>
    tpu.vector_store %arg4[%c0_5, %c0_6], %5 {strides = array<i32>} : memref<8x10xf32, #tpu.memory_space<vmem>>, vector<8x10xf32>,
    return
  }
  func.func @transform_0(%arg0: i32) -> (i32, i32) {
    %c0_i32 = arith.constant 0 : i32
    %c0_i32_0 = arith.constant 0 : i32
    return %arg0, %c0_i32 : i32, i32
  }
  func.func @transform_1(%arg0: i32) -> (i32, i32) {
    %c0_i32 = arith.constant 0 : i32
    %c0_i32_0 = arith.constant 0 : i32
    %c0_i32_1 = arith.constant 0 : i32
    return %c0_i32, %c0_i32_0 : i32, i32
  }
  func.func @transform_2(%arg0: i32) -> (i32, i32) {
    %c0_i32 = arith.constant 0 : i32
    %c0_i32_0 = arith.constant 0 : i32
    %c0_i32_1 = arith.constant 0 : i32
    return %c0_i32, %c0_i32_0 : i32, i32
  }
  func.func @transform_3(%arg0: i32) -> (i32, i32) {
    %c0_i32 = arith.constant 0 : i32
    %c0_i32_0 = arith.constant 0 : i32
    return %arg0, %c0_i32 : i32, i32
  }
}

</mosaic_0001>

<llo_original>
// kernel: fnn1_forward.1
$region0: #{fnn1_forward.1}
  #allocation0 [shape = 'u32[]', space=smem, size = 0x4, offset = 0x4, fixed_abs, tag = 'smem constant byte address 0x4 - core index']
  #allocation1 [shape = 'u32[144,128]{1,0:T(1,128)}', space=vmem, size = 0x12000, scoped, tag = 'internal scratch']
  %s0 = inlined_call_operand.vmem [shape: f32[2,784], index: 0, kind: input, shape index: {}]
  %s1 = inlined_call_operand.vmem [shape: f32[784,10], index: 1, kind: input, shape index: {}]
  %s2 = inlined_call_operand.vmem [shape: f32[1,10], index: 2, kind: input, shape index: {}]
  %s3 = inlined_call_operand.vmem [shape: f32[2,10], index: 3, kind: output, shape index: {}]
  %s4 = sld [smem:[#allocation0]]
  $region52: #{fnn1_forward.1} parent=0
    _
  %s6 = ssub.s32 1, %s4
  %s7 = scalar_select 0, %s6, %s4
  $region1: #{fnn1_forward.1} parent=0
    #allocation2 [shape = 'u8[4096]{0}', space=vmem, size = 0x1000, scoped, tag = 'output window, operand 0, single buffered']
    // Predicated region
    $region2: #{fnn1_forward.1} parent=1 // pred_check
      _
    $region3: #{fnn1_forward.1} parent=1 // pred_check_branch
      %9 = sbr.rel (0) target = $region5
    $region4: #{fnn1_forward.1} parent=1 // pred_region
      _
    $region5: #{fnn1_forward.1} parent=1 // pred_fallthru
      _
    // Predicated region
    $region6: #{fnn1_forward.1} parent=1 // pred_check
      _
    $region7: #{fnn1_forward.1} parent=1 // pred_check_branch
      %11 = sbr.rel (0) target = $region9
    $region8: #{fnn1_forward.1} parent=1 // pred_region
      _
    $region9: #{fnn1_forward.1} parent=1 // pred_fallthru
      _
    // Predicated region
    $region10: #{fnn1_forward.1} parent=1 // pred_check
      _
    $region11: #{fnn1_forward.1} parent=1 // pred_check_branch
      %13 = sbr.rel (0) target = $region13
    $region12: #{fnn1_forward.1} parent=1 // pred_region
      _
    $region13: #{fnn1_forward.1} parent=1 // pred_fallthru
      _
    %v14 = vld [vmem:[%s0] sm:$0xff]
    %v15 = vld [vmem:[%s0 + $0x8] sm:$0x3f]
    %v16 = vld [vmem:[%s0 + $0xe] sm:$0xff]
    %v17 = vld [vmem:[%s0 + $0x16] sm:$0x3f]
    %v18 = vld [vmem:[%s0 + $0x1c] sm:$0xff]
    %v19 = vld [vmem:[%s0 + $0x24] sm:$0x3f]
    %v20 = vld [vmem:[%s0 + $0x2a] sm:$0xff]
    %v21 = vld [vmem:[%s0 + $0x32] sm:$0x3f]
    %v22 = vld [vmem:[%s1] sm:$0xff]
    %v23 = vld [vmem:[%s1 + $0x8] sm:$0xff]
    %v24 = vld [vmem:[%s1 + $0x10] sm:$0xff]
    %v25 = vld [vmem:[%s1 + $0x18] sm:$0xff]
    %v26 = vld [vmem:[%s1 + $0x20] sm:$0xff]
    %v27 = vld [vmem:[%s1 + $0x28] sm:$0xff]
    %v28 = vld [vmem:[%s1 + $0x30] sm:$0xff]
    %v29 = vld [vmem:[%s1 + $0x38] sm:$0xff]
    %v30 = vld [vmem:[%s1 + $0x40] sm:$0xff]
    %v31 = vld [vmem:[%s1 + $0x48] sm:$0xff]
    %v32 = vld [vmem:[%s1 + $0x50] sm:$0xff]
    %v33 = vld [vmem:[%s1 + $0x58] sm:$0xff]
    %v34 = vld [vmem:[%s1 + $0x60] sm:$0xff]
    %v35 = vld [vmem:[%s1 + $0x68] sm:$0xff]
    %v36 = vld [vmem:[%s1 + $0x70] sm:$0xff]
    %v37 = vld [vmem:[%s1 + $0x78] sm:$0xff]
    %v38 = vld [vmem:[%s1 + $0x80] sm:$0xff]
    %v39 = vld [vmem:[%s1 + $0x88] sm:$0xff]
    %v40 = vld [vmem:[%s1 + $0x90] sm:$0xff]
    %v41 = vld [vmem:[%s1 + $0x98] sm:$0xff]
    %v42 = vld [vmem:[%s1 + $0xa0] sm:$0xff]
    %v43 = vld [vmem:[%s1 + $0xa8] sm:$0xff]
    %v44 = vld [vmem:[%s1 + $0xb0] sm:$0xff]
    %v45 = vld [vmem:[%s1 + $0xb8] sm:$0xff]
    %v46 = vld [vmem:[%s1 + $0xc0] sm:$0xff]
    %v47 = vld [vmem:[%s1 + $0xc8] sm:$0xff]
    %v48 = vld [vmem:[%s1 + $0xd0] sm:$0xff]
    %v49 = vld [vmem:[%s1 + $0xd8] sm:$0xff]
    %v50 = vld [vmem:[%s1 + $0xe0] sm:$0xff]
    %v51 = vld [vmem:[%s1 + $0xe8] sm:$0xff]
    %v52 = vld [vmem:[%s1 + $0xf0] sm:$0xff]
    %v53 = vld [vmem:[%s1 + $0xf8] sm:$0xff]
    %v54 = vld [vmem:[%s1 + $0x100] sm:$0xff]
    %v55 = vld [vmem:[%s1 + $0x108] sm:$0xff]
    %v56 = vld [vmem:[%s1 + $0x110] sm:$0xff]
    %v57 = vld [vmem:[%s1 + $0x118] sm:$0xff]
    %v58 = vld [vmem:[%s1 + $0x120] sm:$0xff]
    %v59 = vld [vmem:[%s1 + $0x128] sm:$0xff]
    %v60 = vld [vmem:[%s1 + $0x130] sm:$0xff]
    %v61 = vld [vmem:[%s1 + $0x138] sm:$0xff]
    %v62 = vld [vmem:[%s1 + $0x140] sm:$0xff]
    %v63 = vld [vmem:[%s1 + $0x148] sm:$0xff]
    %v64 = vld [vmem:[%s1 + $0x150] sm:$0xff]
    %v65 = vld [vmem:[%s1 + $0x158] sm:$0xff]
    %v66 = vld [vmem:[%s1 + $0x160] sm:$0xff]
    %v67 = vld [vmem:[%s1 + $0x168] sm:$0xff]
    %v68 = vld [vmem:[%s1 + $0x170] sm:$0xff]
    %v69 = vld [vmem:[%s1 + $0x178] sm:$0xff]
    %v70 = vld [vmem:[%s1 + $0x180] sm:$0xff]
    %v71 = vld [vmem:[%s1 + $0x188] sm:$0xff]
    %v72 = vld [vmem:[%s1 + $0x190] sm:$0xff]
    %v73 = vld [vmem:[%s1 + $0x198] sm:$0xff]
    %v74 = vld [vmem:[%s1 + $0x1a0] sm:$0xff]
    %v75 = vld [vmem:[%s1 + $0x1a8] sm:$0xff]
    %v76 = vld [vmem:[%s1 + $0x1b0] sm:$0xff]
    %v77 = vld [vmem:[%s1 + $0x1b8] sm:$0xff]
    %v78 = vld [vmem:[%s1 + $0x1c0] sm:$0xff]
    %v79 = vld [vmem:[%s1 + $0x1c8] sm:$0xff]
    %v80 = vld [vmem:[%s1 + $0x1d0] sm:$0xff]
    %v81 = vld [vmem:[%s1 + $0x1d8] sm:$0xff]
    %v82 = vld [vmem:[%s1 + $0x1e0] sm:$0xff]
    %v83 = vld [vmem:[%s1 + $0x1e8] sm:$0xff]
    %v84 = vld [vmem:[%s1 + $0x1f0] sm:$0xff]
    %v85 = vld [vmem:[%s1 + $0x1f8] sm:$0xff]
    %v86 = vld [vmem:[%s1 + $0x200] sm:$0xff]
    %v87 = vld [vmem:[%s1 + $0x208] sm:$0xff]
    %v88 = vld [vmem:[%s1 + $0x210] sm:$0xff]
    %v89 = vld [vmem:[%s1 + $0x218] sm:$0xff]
    %v90 = vld [vmem:[%s1 + $0x220] sm:$0xff]
    %v91 = vld [vmem:[%s1 + $0x228] sm:$0xff]
    %v92 = vld [vmem:[%s1 + $0x230] sm:$0xff]
    %v93 = vld [vmem:[%s1 + $0x238] sm:$0xff]
    %v94 = vld [vmem:[%s1 + $0x240] sm:$0xff]
    %v95 = vld [vmem:[%s1 + $0x248] sm:$0xff]
    %v96 = vld [vmem:[%s1 + $0x250] sm:$0xff]
    %v97 = vld [vmem:[%s1 + $0x258] sm:$0xff]
    %v98 = vld [vmem:[%s1 + $0x260] sm:$0xff]
    %v99 = vld [vmem:[%s1 + $0x268] sm:$0xff]
    %v100 = vld [vmem:[%s1 + $0x270] sm:$0xff]
    %v101 = vld [vmem:[%s1 + $0x278] sm:$0xff]
    %v102 = vld [vmem:[%s1 + $0x280] sm:$0xff]
    %v103 = vld [vmem:[%s1 + $0x288] sm:$0xff]
    %v104 = vld [vmem:[%s1 + $0x290] sm:$0xff]
    %v105 = vld [vmem:[%s1 + $0x298] sm:$0xff]
    %v106 = vld [vmem:[%s1 + $0x2a0] sm:$0xff]
    %v107 = vld [vmem:[%s1 + $0x2a8] sm:$0xff]
    %v108 = vld [vmem:[%s1 + $0x2b0] sm:$0xff]
    %v109 = vld [vmem:[%s1 + $0x2b8] sm:$0xff]
    %v110 = vld [vmem:[%s1 + $0x2c0] sm:$0xff]
    %v111 = vld [vmem:[%s1 + $0x2c8] sm:$0xff]
    %v112 = vld [vmem:[%s1 + $0x2d0] sm:$0xff]
    %v113 = vld [vmem:[%s1 + $0x2d8] sm:$0xff]
    %v114 = vld [vmem:[%s1 + $0x2e0] sm:$0xff]
    %v115 = vld [vmem:[%s1 + $0x2e8] sm:$0xff]
    %v116 = vld [vmem:[%s1 + $0x2f0] sm:$0xff]
    %v117 = vld [vmem:[%s1 + $0x2f8] sm:$0xff]
    %v118 = vld [vmem:[%s1 + $0x300] sm:$0xff]
    %v119 = vld [vmem:[%s1 + $0x308] sm:$0xff]
    %v120 = vld [vmem:[%s2] sm:$0x1]
    %v122 = vlaneseq
    %v123 = vshrl.u32 %v122, 7
    %v124 = vsub.s32 0, %v123
    %v125 = vrot.slane %v120, %v124
    %v135 = vcombine.low %v14, %v16
    %v136 = vcombine.high %v14, %v16
    %v137 = vcombine.low %v18, %v20
    %v138 = vcombine.high %v18, %v20
    %v140 = vunpack.c.l.s4 1983009808
    %v141 = vunpack.c.0.s8 %v140
    %v142 = vlaneseq
    %v143 = vshrl.u32 %v142, 7
    %v144 = vsub.s32 %v141, %v143
    %v145 = vrot.slane %v135, %v144
    %v147 = vunpack.c.l.s4 1983009808
    %v148 = vunpack.c.0.s8 %v147
    %v149 = vlaneseq
    %v150 = vshrl.u32 %v149, 7
    %v151 = vsub.s32 %v148, %v150
    %v152 = vrot.slane %v136, %v151
    %v154 = vunpack.c.l.s4 1983009808
    %v155 = vunpack.c.0.s8 %v154
    %v156 = vlaneseq
    %v157 = vshrl.u32 %v156, 7
    %v158 = vsub.s32 %v155, %v157
    %v159 = vrot.slane %v137, %v158
    %v161 = vunpack.c.l.s4 1983009808
    %v162 = vunpack.c.0.s8 %v161
    %v163 = vlaneseq
    %v164 = vshrl.u32 %v163, 7
    %v165 = vsub.s32 %v162, %v164
    %v166 = vrot.slane %v138, %v165
    %v167 = vcombine.low %v145, %v159
    %v168 = vcombine.high %v145, %v159
    %v169 = vcombine.low %v152, %v166
    %v170 = vcombine.high %v152, %v166
    %v171 = vcombine.low %v15, %v17
    %v172 = vcombine.high %v15, %v17
    %v173 = vcombine.low %v19, %v21
    %v174 = vcombine.high %v19, %v21
    %v176 = vunpack.c.l.s4 1983009808
    %v177 = vunpack.c.0.s8 %v176
    %v178 = vlaneseq
    %v179 = vshrl.u32 %v178, 7
    %v180 = vsub.s32 %v177, %v179
    %v181 = vrot.slane %v171, %v180
    %v183 = vunpack.c.l.s4 1983009808
    %v184 = vunpack.c.0.s8 %v183
    %v185 = vlaneseq
    %v186 = vshrl.u32 %v185, 7
    %v187 = vsub.s32 %v184, %v186
    %v188 = vrot.slane %v172, %v187
    %v190 = vunpack.c.l.s4 1983009808
    %v191 = vunpack.c.0.s8 %v190
    %v192 = vlaneseq
    %v193 = vshrl.u32 %v192, 7
    %v194 = vsub.s32 %v191, %v193
    %v195 = vrot.slane %v173, %v194
    %v197 = vunpack.c.l.s4 1983009808
    %v198 = vunpack.c.0.s8 %v197
    %v199 = vlaneseq
    %v200 = vshrl.u32 %v199, 7
    %v201 = vsub.s32 %v198, %v200
    %v202 = vrot.slane %v174, %v201
    %v203 = vcombine.low %v181, %v195
    %v204 = vcombine.high %v181, %v195
    %v205 = vcombine.low %v188, %v202
    %vm212 = vcmask 130048
    %v213 = vsel %vm212, %v205, 0
    %215 = vmatprep.subr.mxu0 0.0
    %v216 = vand.u32 %v37, 4294901760
    %217 = vmatpush1.msra.mxu0 %v216
    %218 = vmatprep.subr.mxu0 0.0
    %v219 = vand.u32 %v36, 4294901760
    %220 = vmatpush1.msra.mxu0 %v219
    %221 = vmatprep.subr.mxu0 0.0
    %v222 = vand.u32 %v35, 4294901760
    %223 = vmatpush1.msra.mxu0 %v222
    %224 = vmatprep.subr.mxu0 0.0
    %v225 = vand.u32 %v34, 4294901760
    %226 = vmatpush1.msra.mxu0 %v225
    %227 = vmatprep.subr.mxu0 0.0
    %v228 = vand.u32 %v33, 4294901760
    %229 = vmatpush1.msra.mxu0 %v228
    %230 = vmatprep.subr.mxu0 0.0
    %v231 = vand.u32 %v32, 4294901760
    %232 = vmatpush1.msra.mxu0 %v231
    %233 = vmatprep.subr.mxu0 0.0
    %v234 = vand.u32 %v31, 4294901760
    %235 = vmatpush1.msra.mxu0 %v234
    %236 = vmatprep.subr.mxu0 0.0
    %v237 = vand.u32 %v30, 4294901760
    %238 = vmatpush1.msra.mxu0 %v237
    %239 = vmatprep.subr.mxu0 0.0
    %v240 = vand.u32 %v29, 4294901760
    %241 = vmatpush1.msra.mxu0 %v240
    %242 = vmatprep.subr.mxu0 0.0
    %v243 = vand.u32 %v28, 4294901760
    %244 = vmatpush1.msra.mxu0 %v243
    %245 = vmatprep.subr.mxu0 0.0
    %v246 = vand.u32 %v27, 4294901760
    %247 = vmatpush1.msra.mxu0 %v246
    %248 = vmatprep.subr.mxu0 0.0
    %v249 = vand.u32 %v26, 4294901760
    %250 = vmatpush1.msra.mxu0 %v249
    %251 = vmatprep.subr.mxu0 0.0
    %v252 = vand.u32 %v25, 4294901760
    %253 = vmatpush1.msra.mxu0 %v252
    %254 = vmatprep.subr.mxu0 0.0
    %v255 = vand.u32 %v24, 4294901760
    %256 = vmatpush1.msra.mxu0 %v255
    %257 = vmatprep.subr.mxu0 0.0
    %v258 = vand.u32 %v23, 4294901760
    %259 = vmatpush1.msra.mxu0 %v258
    %260 = vmatprep.subr.mxu0 0.0
    %v261 = vand.u32 %v22, 4294901760
    %262 = vmatpush1.msra.mxu0 %v261
    %263 = vmatprep.subr.mxu0 0.0
    %v264 = vand.u32 %v53, 4294901760
    %265 = vmatpush2.msra.mxu0 %v264
    %266 = vmatprep.subr.mxu0 0.0
    %v267 = vand.u32 %v52, 4294901760
    %268 = vmatpush2.msra.mxu0 %v267
    %269 = vmatprep.subr.mxu0 0.0
    %v270 = vand.u32 %v51, 4294901760
    %271 = vmatpush2.msra.mxu0 %v270
    %272 = vmatprep.subr.mxu0 0.0
    %v273 = vand.u32 %v50, 4294901760
    %274 = vmatpush2.msra.mxu0 %v273
    %275 = vmatprep.subr.mxu0 0.0
    %v276 = vand.u32 %v49, 4294901760
    %277 = vmatpush2.msra.mxu0 %v276
    %278 = vmatprep.subr.mxu0 0.0
    %v279 = vand.u32 %v48, 4294901760
    %280 = vmatpush2.msra.mxu0 %v279
    %281 = vmatprep.subr.mxu0 0.0
    %v282 = vand.u32 %v47, 4294901760
    %283 = vmatpush2.msra.mxu0 %v282
    %284 = vmatprep.subr.mxu0 0.0
    %v285 = vand.u32 %v46, 4294901760
    %286 = vmatpush2.msra.mxu0 %v285
    %287 = vmatprep.subr.mxu0 0.0
    %v288 = vand.u32 %v45, 4294901760
    %289 = vmatpush2.msra.mxu0 %v288
    %290 = vmatprep.subr.mxu0 0.0
    %v291 = vand.u32 %v44, 4294901760
    %292 = vmatpush2.msra.mxu0 %v291
    %293 = vmatprep.subr.mxu0 0.0
    %v294 = vand.u32 %v43, 4294901760
    %295 = vmatpush2.msra.mxu0 %v294
    %296 = vmatprep.subr.mxu0 0.0
    %v297 = vand.u32 %v42, 4294901760
    %298 = vmatpush2.msra.mxu0 %v297
    %299 = vmatprep.subr.mxu0 0.0
    %v300 = vand.u32 %v41, 4294901760
    %301 = vmatpush2.msra.mxu0 %v300
    %302 = vmatprep.subr.mxu0 0.0
    %v303 = vand.u32 %v40, 4294901760
    %304 = vmatpush2.msra.mxu0 %v303
    %305 = vmatprep.subr.mxu0 0.0
    %v306 = vand.u32 %v39, 4294901760
    %307 = vmatpush2.msra.mxu0 %v306
    %308 = vmatprep.subr.mxu0 0.0
    %v309 = vand.u32 %v38, 4294901760
    %310 = vmatpush2.msra.mxu0 %v309
    %v311 = vand.u32 %v168, 4294901760
    %v312 = vsub.f32 %v168, %v311
    %v313 = vand.u32 %v312, 4294901760
    %v314 = vsub.f32 %v312, %v313
    %v315 = vand.u32 %v314, 4294901760
    %316 = vmatprep.mubr.f32.mxu0 %v315
    %v317 = vand.u32 %v167, 4294901760
    %v318 = vsub.f32 %v167, %v317
    %v319 = vand.u32 %v318, 4294901760
    %v320 = vsub.f32 %v318, %v319
    %v321 = vand.u32 %v320, 4294901760
    %322 = vmatmul.mubr.f32.gmra.mxu0 %v321
    %v323 = vpop.f32.mrf.mxu0
    %v324 = vadd.f32 %v125, %v323
    %v325 = vpop.f32.mrf.mxu0
    %326 = vdwg.mxu0
    %327 = vmatprep.subr.mxu0 0.0
    %v328 = vand.u32 %v37, 4294901760
    %v329 = vsub.f32 %v37, %v328
    %v330 = vand.u32 %v329, 4294901760
    %v331 = vsub.f32 %v329, %v330
    %v332 = vand.u32 %v331, 4294901760
    %333 = vmatpush1.msra.mxu0 %v332
    %334 = vmatprep.subr.mxu0 0.0
    %v335 = vand.u32 %v36, 4294901760
    %v336 = vsub.f32 %v36, %v335
    %v337 = vand.u32 %v336, 4294901760
    %v338 = vsub.f32 %v336, %v337
    %v339 = vand.u32 %v338, 4294901760
    %340 = vmatpush1.msra.mxu0 %v339
    %341 = vmatprep.subr.mxu0 0.0
    %v342 = vand.u32 %v35, 4294901760
    %v343 = vsub.f32 %v35, %v342
    %v344 = vand.u32 %v343, 4294901760
    %v345 = vsub.f32 %v343, %v344
    %v346 = vand.u32 %v345, 4294901760
    %347 = vmatpush1.msra.mxu0 %v346
    %348 = vmatprep.subr.mxu0 0.0
    %v349 = vand.u32 %v34, 4294901760
    %v350 = vsub.f32 %v34, %v349
    %v351 = vand.u32 %v350, 4294901760
    %v352 = vsub.f32 %v350, %v351
    %v353 = vand.u32 %v352, 4294901760
    %354 = vmatpush1.msra.mxu0 %v353
    %355 = vmatprep.subr.mxu0 0.0
    %v356 = vand.u32 %v33, 4294901760
    %v357 = vsub.f32 %v33, %v356
    %v358 = vand.u32 %v357, 4294901760
    %v359 = vsub.f32 %v357, %v358
    %v360 = vand.u32 %v359, 4294901760
    %361 = vmatpush1.msra.mxu0 %v360
    %362 = vmatprep.subr.mxu0 0.0
    %v363 = vand.u32 %v32, 4294901760
    %v364 = vsub.f32 %v32, %v363
    %v365 = vand.u32 %v364, 4294901760
    %v366 = vsub.f32 %v364, %v365
    %v367 = vand.u32 %v366, 4294901760
    %368 = vmatpush1.msra.mxu0 %v367
    %369 = vmatprep.subr.mxu0 0.0
    %v370 = vand.u32 %v31, 4294901760
    %v371 = vsub.f32 %v31, %v370
    %v372 = vand.u32 %v371, 4294901760
    %v373 = vsub.f32 %v371, %v372
    %v374 = vand.u32 %v373, 4294901760
    %375 = vmatpush1.msra.mxu0 %v374
    %376 = vmatprep.subr.mxu0 0.0
    %v377 = vand.u32 %v30, 4294901760
    %v378 = vsub.f32 %v30, %v377
    %v379 = vand.u32 %v378, 4294901760
    %v380 = vsub.f32 %v378, %v379
    %v381 = vand.u32 %v380, 4294901760
    %382 = vmatpush1.msra.mxu0 %v381
    %383 = vmatprep.subr.mxu0 0.0
    %v384 = vand.u32 %v29, 4294901760
    %v385 = vsub.f32 %v29, %v384
    %v386 = vand.u32 %v385, 4294901760
    %v387 = vsub.f32 %v385, %v386
    %v388 = vand.u32 %v387, 4294901760
    %389 = vmatpush1.msra.mxu0 %v388
    %390 = vmatprep.subr.mxu0 0.0
    %v391 = vand.u32 %v28, 4294901760
    %v392 = vsub.f32 %v28, %v391
    %v393 = vand.u32 %v392, 4294901760
    %v394 = vsub.f32 %v392, %v393
    %v395 = vand.u32 %v394, 4294901760
    %396 = vmatpush1.msra.mxu0 %v395
    %397 = vmatprep.subr.mxu0 0.0
    %v398 = vand.u32 %v27, 4294901760
    %v399 = vsub.f32 %v27, %v398
    %v400 = vand.u32 %v399, 4294901760
    %v401 = vsub.f32 %v399, %v400
    %v402 = vand.u32 %v401, 4294901760
    %403 = vmatpush1.msra.mxu0 %v402
    %404 = vmatprep.subr.mxu0 0.0
    %v405 = vand.u32 %v26, 4294901760
    %v406 = vsub.f32 %v26, %v405
    %v407 = vand.u32 %v406, 4294901760
    %v408 = vsub.f32 %v406, %v407
    %v409 = vand.u32 %v408, 4294901760
    %410 = vmatpush1.msra.mxu0 %v409
    %411 = vmatprep.subr.mxu0 0.0
    %v412 = vand.u32 %v25, 4294901760
    %v413 = vsub.f32 %v25, %v412
    %v414 = vand.u32 %v413, 4294901760
    %v415 = vsub.f32 %v413, %v414
    %v416 = vand.u32 %v415, 4294901760
    %417 = vmatpush1.msra.mxu0 %v416
    %418 = vmatprep.subr.mxu0 0.0
    %v419 = vand.u32 %v24, 4294901760
    %v420 = vsub.f32 %v24, %v419
    %v421 = vand.u32 %v420, 4294901760
    %v422 = vsub.f32 %v420, %v421
    %v423 = vand.u32 %v422, 4294901760
    %424 = vmatpush1.msra.mxu0 %v423
    %425 = vmatprep.subr.mxu0 0.0
    %v426 = vand.u32 %v23, 4294901760
    %v427 = vsub.f32 %v23, %v426
    %v428 = vand.u32 %v427, 4294901760
    %v429 = vsub.f32 %v427, %v428
    %v430 = vand.u32 %v429, 4294901760
    %431 = vmatpush1.msra.mxu0 %v430
    %432 = vmatprep.subr.mxu0 0.0
    %v433 = vand.u32 %v22, 4294901760
    %v434 = vsub.f32 %v22, %v433
    %v435 = vand.u32 %v434, 4294901760
    %v436 = vsub.f32 %v434, %v435
    %v437 = vand.u32 %v436, 4294901760
    %438 = vmatpush1.msra.mxu0 %v437
    %439 = vmatprep.subr.mxu0 0.0
    %v440 = vand.u32 %v53, 4294901760
    %v441 = vsub.f32 %v53, %v440
    %v442 = vand.u32 %v441, 4294901760
    %v443 = vsub.f32 %v441, %v442
    %v444 = vand.u32 %v443, 4294901760
    %445 = vmatpush2.msra.mxu0 %v444
    %446 = vmatprep.subr.mxu0 0.0
    %v447 = vand.u32 %v52, 4294901760
    %v448 = vsub.f32 %v52, %v447
    %v449 = vand.u32 %v448, 4294901760
    %v450 = vsub.f32 %v448, %v449
    %v451 = vand.u32 %v450, 4294901760
    %452 = vmatpush2.msra.mxu0 %v451
    %453 = vmatprep.subr.mxu0 0.0
    %v454 = vand.u32 %v51, 4294901760
    %v455 = vsub.f32 %v51, %v454
    %v456 = vand.u32 %v455, 4294901760
    %v457 = vsub.f32 %v455, %v456
    %v458 = vand.u32 %v457, 4294901760
    %459 = vmatpush2.msra.mxu0 %v458
    %460 = vmatprep.subr.mxu0 0.0
    %v461 = vand.u32 %v50, 4294901760
    %v462 = vsub.f32 %v50, %v461
    %v463 = vand.u32 %v462, 4294901760
    %v464 = vsub.f32 %v462, %v463
    %v465 = vand.u32 %v464, 4294901760
    %466 = vmatpush2.msra.mxu0 %v465
    %467 = vmatprep.subr.mxu0 0.0
    %v468 = vand.u32 %v49, 4294901760
    %v469 = vsub.f32 %v49, %v468
    %v470 = vand.u32 %v469, 4294901760
    %v471 = vsub.f32 %v469, %v470
    %v472 = vand.u32 %v471, 4294901760
    %473 = vmatpush2.msra.mxu0 %v472
    %474 = vmatprep.subr.mxu0 0.0
    %v475 = vand.u32 %v48, 4294901760
    %v476 = vsub.f32 %v48, %v475
    %v477 = vand.u32 %v476, 4294901760
    %v478 = vsub.f32 %v476, %v477
    %v479 = vand.u32 %v478, 4294901760
    %480 = vmatpush2.msra.mxu0 %v479
    %481 = vmatprep.subr.mxu0 0.0
    %v482 = vand.u32 %v47, 4294901760
    %v483 = vsub.f32 %v47, %v482
    %v484 = vand.u32 %v483, 4294901760
    %v485 = vsub.f32 %v483, %v484
    %v486 = vand.u32 %v485, 4294901760
    %487 = vmatpush2.msra.mxu0 %v486
    %488 = vmatprep.subr.mxu0 0.0
    %v489 = vand.u32 %v46, 4294901760
    %v490 = vsub.f32 %v46, %v489
    %v491 = vand.u32 %v490, 4294901760
    %v492 = vsub.f32 %v490, %v491
    %v493 = vand.u32 %v492, 4294901760
    %494 = vmatpush2.msra.mxu0 %v493
    %495 = vmatprep.subr.mxu0 0.0
    %v496 = vand.u32 %v45, 4294901760
    %v497 = vsub.f32 %v45, %v496
    %v498 = vand.u32 %v497, 4294901760
    %v499 = vsub.f32 %v497, %v498
    %v500 = vand.u32 %v499, 4294901760
    %501 = vmatpush2.msra.mxu0 %v500
    %502 = vmatprep.subr.mxu0 0.0
    %v503 = vand.u32 %v44, 4294901760
    %v504 = vsub.f32 %v44, %v503
    %v505 = vand.u32 %v504, 4294901760
    %v506 = vsub.f32 %v504, %v505
    %v507 = vand.u32 %v506, 4294901760
    %508 = vmatpush2.msra.mxu0 %v507
    %509 = vmatprep.subr.mxu0 0.0
    %v510 = vand.u32 %v43, 4294901760
    %v511 = vsub.f32 %v43, %v510
    %v512 = vand.u32 %v511, 4294901760
    %v513 = vsub.f32 %v511, %v512
    %v514 = vand.u32 %v513, 4294901760
    %515 = vmatpush2.msra.mxu0 %v514
    %516 = vmatprep.subr.mxu0 0.0
    %v517 = vand.u32 %v42, 4294901760
    %v518 = vsub.f32 %v42, %v517
    %v519 = vand.u32 %v518, 4294901760
    %v520 = vsub.f32 %v518, %v519
    %v521 = vand.u32 %v520, 4294901760
    %522 = vmatpush2.msra.mxu0 %v521
    %523 = vmatprep.subr.mxu0 0.0
    %v524 = vand.u32 %v41, 4294901760
    %v525 = vsub.f32 %v41, %v524
    %v526 = vand.u32 %v525, 4294901760
    %v527 = vsub.f32 %v525, %v526
    %v528 = vand.u32 %v527, 4294901760
    %529 = vmatpush2.msra.mxu0 %v528
    %530 = vmatprep.subr.mxu0 0.0
    %v531 = vand.u32 %v40, 4294901760
    %v532 = vsub.f32 %v40, %v531
    %v533 = vand.u32 %v532, 4294901760
    %v534 = vsub.f32 %v532, %v533
    %v535 = vand.u32 %v534, 4294901760
    %536 = vmatpush2.msra.mxu0 %v535
    %537 = vmatprep.subr.mxu0 0.0
    %v538 = vand.u32 %v39, 4294901760
    %v539 = vsub.f32 %v39, %v538
    %v540 = vand.u32 %v539, 4294901760
    %v541 = vsub.f32 %v539, %v540
    %v542 = vand.u32 %v541, 4294901760
    %543 = vmatpush2.msra.mxu0 %v542
    %544 = vmatprep.subr.mxu0 0.0
    %v545 = vand.u32 %v38, 4294901760
    %v546 = vsub.f32 %v38, %v545
    %v547 = vand.u32 %v546, 4294901760
    %v548 = vsub.f32 %v546, %v547
    %v549 = vand.u32 %v548, 4294901760
    %550 = vmatpush2.msra.mxu0 %v549
    %v551 = vand.u32 %v168, 4294901760
    %552 = vmatprep.mubr.f32.mxu0 %v551
    %v553 = vand.u32 %v167, 4294901760
    %554 = vmatmul.mubr.f32.gmra.mxu0 %v553
    %v555 = vpop.f32.mrf.mxu0
    %v556 = vadd.f32 %v324, %v555
    %v557 = vpop.f32.mrf.mxu0
    %558 = vdwg.mxu0
    %559 = vmatprep.subr.mxu0 0.0
    %v560 = vand.u32 %v37, 4294901760
    %v561 = vsub.f32 %v37, %v560
    %562 = vmatpush1.msra.mxu0 %v561
    %563 = vmatprep.subr.mxu0 0.0
    %v564 = vand.u32 %v36, 4294901760
    %v565 = vsub.f32 %v36, %v564
    %566 = vmatpush1.msra.mxu0 %v565
    %567 = vmatprep.subr.mxu0 0.0
    %v568 = vand.u32 %v35, 4294901760
    %v569 = vsub.f32 %v35, %v568
    %570 = vmatpush1.msra.mxu0 %v569
    %571 = vmatprep.subr.mxu0 0.0
    %v572 = vand.u32 %v34, 4294901760
    %v573 = vsub.f32 %v34, %v572
    %574 = vmatpush1.msra.mxu0 %v573
    %575 = vmatprep.subr.mxu0 0.0
    %v576 = vand.u32 %v33, 4294901760
    %v577 = vsub.f32 %v33, %v576
    %578 = vmatpush1.msra.mxu0 %v577
    %579 = vmatprep.subr.mxu0 0.0
    %v580 = vand.u32 %v32, 4294901760
    %v581 = vsub.f32 %v32, %v580
    %582 = vmatpush1.msra.mxu0 %v581
    %583 = vmatprep.subr.mxu0 0.0
    %v584 = vand.u32 %v31, 4294901760
    %v585 = vsub.f32 %v31, %v584
    %586 = vmatpush1.msra.mxu0 %v585
    %587 = vmatprep.subr.mxu0 0.0
    %v588 = vand.u32 %v30, 4294901760
    %v589 = vsub.f32 %v30, %v588
    %590 = vmatpush1.msra.mxu0 %v589
    %591 = vmatprep.subr.mxu0 0.0
    %v592 = vand.u32 %v29, 4294901760
    %v593 = vsub.f32 %v29, %v592
    %594 = vmatpush1.msra.mxu0 %v593
    %595 = vmatprep.subr.mxu0 0.0
    %v596 = vand.u32 %v28, 4294901760
    %v597 = vsub.f32 %v28, %v596
    %598 = vmatpush1.msra.mxu0 %v597
    %599 = vmatprep.subr.mxu0 0.0
    %v600 = vand.u32 %v27, 4294901760
    %v601 = vsub.f32 %v27, %v600
    %602 = vmatpush1.msra.mxu0 %v601
    %603 = vmatprep.subr.mxu0 0.0
    %v604 = vand.u32 %v26, 4294901760
    %v605 = vsub.f32 %v26, %v604
    %606 = vmatpush1.msra.mxu0 %v605
    %607 = vmatprep.subr.mxu0 0.0
    %v608 = vand.u32 %v25, 4294901760
    %v609 = vsub.f32 %v25, %v608
    %610 = vmatpush1.msra.mxu0 %v609
    %611 = vmatprep.subr.mxu0 0.0
    %v612 = vand.u32 %v24, 4294901760
    %v613 = vsub.f32 %v24, %v612
    %614 = vmatpush1.msra.mxu0 %v613
    %615 = vmatprep.subr.mxu0 0.0
    %v616 = vand.u32 %v23, 4294901760
    %v617 = vsub.f32 %v23, %v616
    %618 = vmatpush1.msra.mxu0 %v617
    %619 = vmatprep.subr.mxu0 0.0
    %v620 = vand.u32 %v22, 4294901760
    %v621 = vsub.f32 %v22, %v620
    %622 = vmatpush1.msra.mxu0 %v621
    %623 = vmatprep.subr.mxu0 0.0
    %v624 = vand.u32 %v53, 4294901760
    %v625 = vsub.f32 %v53, %v624
    %626 = vmatpush2.msra.mxu0 %v625
    %627 = vmatprep.subr.mxu0 0.0
    %v628 = vand.u32 %v52, 4294901760
    %v629 = vsub.f32 %v52, %v628
    %630 = vmatpush2.msra.mxu0 %v629
    %631 = vmatprep.subr.mxu0 0.0
    %v632 = vand.u32 %v51, 4294901760
    %v633 = vsub.f32 %v51, %v632
    %634 = vmatpush2.msra.mxu0 %v633
    %635 = vmatprep.subr.mxu0 0.0
    %v636 = vand.u32 %v50, 4294901760
    %v637 = vsub.f32 %v50, %v636
    %638 = vmatpush2.msra.mxu0 %v637
    %639 = vmatprep.subr.mxu0 0.0
    %v640 = vand.u32 %v49, 4294901760
    %v641 = vsub.f32 %v49, %v640
    %642 = vmatpush2.msra.mxu0 %v641
    %643 = vmatprep.subr.mxu0 0.0
    %v644 = vand.u32 %v48, 4294901760
    %v645 = vsub.f32 %v48, %v644
    %646 = vmatpush2.msra.mxu0 %v645
    %647 = vmatprep.subr.mxu0 0.0
    %v648 = vand.u32 %v47, 4294901760
    %v649 = vsub.f32 %v47, %v648
    %650 = vmatpush2.msra.mxu0 %v649
    %651 = vmatprep.subr.mxu0 0.0
    %v652 = vand.u32 %v46, 4294901760
    %v653 = vsub.f32 %v46, %v652
    %654 = vmatpush2.msra.mxu0 %v653
    %655 = vmatprep.subr.mxu0 0.0
    %v656 = vand.u32 %v45, 4294901760
    %v657 = vsub.f32 %v45, %v656
    %658 = vmatpush2.msra.mxu0 %v657
    %659 = vmatprep.subr.mxu0 0.0
    %v660 = vand.u32 %v44, 4294901760
    %v661 = vsub.f32 %v44, %v660
    %662 = vmatpush2.msra.mxu0 %v661
    %663 = vmatprep.subr.mxu0 0.0
    %v664 = vand.u32 %v43, 4294901760
    %v665 = vsub.f32 %v43, %v664
    %666 = vmatpush2.msra.mxu0 %v665
    %667 = vmatprep.subr.mxu0 0.0
    %v668 = vand.u32 %v42, 4294901760
    %v669 = vsub.f32 %v42, %v668
    %670 = vmatpush2.msra.mxu0 %v669
    %671 = vmatprep.subr.mxu0 0.0
    %v672 = vand.u32 %v41, 4294901760
    %v673 = vsub.f32 %v41, %v672
    %674 = vmatpush2.msra.mxu0 %v673
    %675 = vmatprep.subr.mxu0 0.0
    %v676 = vand.u32 %v40, 4294901760
    %v677 = vsub.f32 %v40, %v676
    %678 = vmatpush2.msra.mxu0 %v677
    %679 = vmatprep.subr.mxu0 0.0
    %v680 = vand.u32 %v39, 4294901760
    %v681 = vsub.f32 %v39, %v680
    %682 = vmatpush2.msra.mxu0 %v681
    %683 = vmatprep.subr.mxu0 0.0
    %v684 = vand.u32 %v38, 4294901760
    %v685 = vsub.f32 %v38, %v684
    %686 = vmatpush2.msra.mxu0 %v685
    %v687 = vand.u32 %v168, 4294901760
    %v688 = vsub.f32 %v168, %v687
    %689 = vmatprep.mubr.f32.mxu0 %v688
    %v690 = vand.u32 %v167, 4294901760
    %v691 = vsub.f32 %v167, %v690
    %692 = vmatmul.mubr.f32.gmra.mxu0 %v691
    %v693 = vpop.f32.mrf.mxu0
    %v694 = vadd.f32 %v556, %v693
    %v695 = vpop.f32.mrf.mxu0
    %696 = vdwg.mxu0
    %697 = vmatprep.subr.mxu0 0.0
    %v698 = vand.u32 %v37, 4294901760
    %699 = vmatpush1.msra.mxu0 %v698
    %700 = vmatprep.subr.mxu0 0.0
    %v701 = vand.u32 %v36, 4294901760
    %702 = vmatpush1.msra.mxu0 %v701
    %703 = vmatprep.subr.mxu0 0.0
    %v704 = vand.u32 %v35, 4294901760
    %705 = vmatpush1.msra.mxu0 %v704
    %706 = vmatprep.subr.mxu0 0.0
    %v707 = vand.u32 %v34, 4294901760
    %708 = vmatpush1.msra.mxu0 %v707
    %709 = vmatprep.subr.mxu0 0.0
    %v710 = vand.u32 %v33, 4294901760
    %711 = vmatpush1.msra.mxu0 %v710
    %712 = vmatprep.subr.mxu0 0.0
    %v713 = vand.u32 %v32, 4294901760
    %714 = vmatpush1.msra.mxu0 %v713
    %715 = vmatprep.subr.mxu0 0.0
    %v716 = vand.u32 %v31, 4294901760
    %717 = vmatpush1.msra.mxu0 %v716
    %718 = vmatprep.subr.mxu0 0.0
    %v719 = vand.u32 %v30, 4294901760
    %720 = vmatpush1.msra.mxu0 %v719
    %721 = vmatprep.subr.mxu0 0.0
    %v722 = vand.u32 %v29, 4294901760
    %723 = vmatpush1.msra.mxu0 %v722
    %724 = vmatprep.subr.mxu0 0.0
    %v725 = vand.u32 %v28, 4294901760
    %726 = vmatpush1.msra.mxu0 %v725
    %727 = vmatprep.subr.mxu0 0.0
    %v728 = vand.u32 %v27, 4294901760
    %729 = vmatpush1.msra.mxu0 %v728
    %730 = vmatprep.subr.mxu0 0.0
    %v731 = vand.u32 %v26, 4294901760
    %732 = vmatpush1.msra.mxu0 %v731
    %733 = vmatprep.subr.mxu0 0.0
    %v734 = vand.u32 %v25, 4294901760
    %735 = vmatpush1.msra.mxu0 %v734
    %736 = vmatprep.subr.mxu0 0.0
    %v737 = vand.u32 %v24, 4294901760
    %738 = vmatpush1.msra.mxu0 %v737
    %739 = vmatprep.subr.mxu0 0.0
    %v740 = vand.u32 %v23, 4294901760
    %741 = vmatpush1.msra.mxu0 %v740
    %742 = vmatprep.subr.mxu0 0.0
    %v743 = vand.u32 %v22, 4294901760
    %744 = vmatpush1.msra.mxu0 %v743
    %745 = vmatprep.subr.mxu0 0.0
    %v746 = vand.u32 %v53, 4294901760
    %747 = vmatpush2.msra.mxu0 %v746
    %748 = vmatprep.subr.mxu0 0.0
    %v749 = vand.u32 %v52, 4294901760
    %750 = vmatpush2.msra.mxu0 %v749
    %751 = vmatprep.subr.mxu0 0.0
    %v752 = vand.u32 %v51, 4294901760
    %753 = vmatpush2.msra.mxu0 %v752
    %754 = vmatprep.subr.mxu0 0.0
    %v755 = vand.u32 %v50, 4294901760
    %756 = vmatpush2.msra.mxu0 %v755
    %757 = vmatprep.subr.mxu0 0.0
    %v758 = vand.u32 %v49, 4294901760
    %759 = vmatpush2.msra.mxu0 %v758
    %760 = vmatprep.subr.mxu0 0.0
    %v761 = vand.u32 %v48, 4294901760
    %762 = vmatpush2.msra.mxu0 %v761
    %763 = vmatprep.subr.mxu0 0.0
    %v764 = vand.u32 %v47, 4294901760
    %765 = vmatpush2.msra.mxu0 %v764
    %766 = vmatprep.subr.mxu0 0.0
    %v767 = vand.u32 %v46, 4294901760
    %768 = vmatpush2.msra.mxu0 %v767
    %769 = vmatprep.subr.mxu0 0.0
    %v770 = vand.u32 %v45, 4294901760
    %771 = vmatpush2.msra.mxu0 %v770
    %772 = vmatprep.subr.mxu0 0.0
    %v773 = vand.u32 %v44, 4294901760
    %774 = vmatpush2.msra.mxu0 %v773
    %775 = vmatprep.subr.mxu0 0.0
    %v776 = vand.u32 %v43, 4294901760
    %777 = vmatpush2.msra.mxu0 %v776
    %778 = vmatprep.subr.mxu0 0.0
    %v779 = vand.u32 %v42, 4294901760
    %780 = vmatpush2.msra.mxu0 %v779
    %781 = vmatprep.subr.mxu0 0.0
    %v782 = vand.u32 %v41, 4294901760
    %783 = vmatpush2.msra.mxu0 %v782
    %784 = vmatprep.subr.mxu0 0.0
    %v785 = vand.u32 %v40, 4294901760
    %786 = vmatpush2.msra.mxu0 %v785
    %787 = vmatprep.subr.mxu0 0.0
    %v788 = vand.u32 %v39, 4294901760
    %789 = vmatpush2.msra.mxu0 %v788
    %790 = vmatprep.subr.mxu0 0.0
    %v791 = vand.u32 %v38, 4294901760
    %792 = vmatpush2.msra.mxu0 %v791
    %v793 = vand.u32 %v168, 4294901760
    %v794 = vsub.f32 %v168, %v793
    %v795 = vand.u32 %v794, 4294901760
    %796 = vmatprep.mubr.f32.mxu0 %v795
    %v797 = vand.u32 %v167, 4294901760
    %v798 = vsub.f32 %v167, %v797
    %v799 = vand.u32 %v798, 4294901760
    %800 = vmatmul.mubr.f32.gmra.mxu0 %v799
    %v801 = vpop.f32.mrf.mxu0
    %v802 = vadd.f32 %v694, %v801
    %v803 = vpop.f32.mrf.mxu0
    %804 = vdwg.mxu0
    %805 = vmatprep.subr.mxu0 0.0
    %v806 = vand.u32 %v37, 4294901760
    %v807 = vsub.f32 %v37, %v806
    %v808 = vand.u32 %v807, 4294901760
    %809 = vmatpush1.msra.mxu0 %v808
    %810 = vmatprep.subr.mxu0 0.0
    %v811 = vand.u32 %v36, 4294901760
    %v812 = vsub.f32 %v36, %v811
    %v813 = vand.u32 %v812, 4294901760
    %814 = vmatpush1.msra.mxu0 %v813
    %815 = vmatprep.subr.mxu0 0.0
    %v816 = vand.u32 %v35, 4294901760
    %v817 = vsub.f32 %v35, %v816
    %v818 = vand.u32 %v817, 4294901760
    %819 = vmatpush1.msra.mxu0 %v818
    %820 = vmatprep.subr.mxu0 0.0
    %v821 = vand.u32 %v34, 4294901760
    %v822 = vsub.f32 %v34, %v821
    %v823 = vand.u32 %v822, 4294901760
    %824 = vmatpush1.msra.mxu0 %v823
    %825 = vmatprep.subr.mxu0 0.0
    %v826 = vand.u32 %v33, 4294901760
    %v827 = vsub.f32 %v33, %v826
    %v828 = vand.u32 %v827, 4294901760
    %829 = vmatpush1.msra.mxu0 %v828
    %830 = vmatprep.subr.mxu0 0.0
    %v831 = vand.u32 %v32, 4294901760
    %v832 = vsub.f32 %v32, %v831
    %v833 = vand.u32 %v832, 4294901760
    %834 = vmatpush1.msra.mxu0 %v833
    %835 = vmatprep.subr.mxu0 0.0
    %v836 = vand.u32 %v31, 4294901760
    %v837 = vsub.f32 %v31, %v836
    %v838 = vand.u32 %v837, 4294901760
    %839 = vmatpush1.msra.mxu0 %v838
    %840 = vmatprep.subr.mxu0 0.0
    %v841 = vand.u32 %v30, 4294901760
    %v842 = vsub.f32 %v30, %v841
    %v843 = vand.u32 %v842, 4294901760
    %844 = vmatpush1.msra.mxu0 %v843
    %845 = vmatprep.subr.mxu0 0.0
    %v846 = vand.u32 %v29, 4294901760
    %v847 = vsub.f32 %v29, %v846
    %v848 = vand.u32 %v847, 4294901760
    %849 = vmatpush1.msra.mxu0 %v848
    %850 = vmatprep.subr.mxu0 0.0
    %v851 = vand.u32 %v28, 4294901760
    %v852 = vsub.f32 %v28, %v851
    %v853 = vand.u32 %v852, 4294901760
    %854 = vmatpush1.msra.mxu0 %v853
    %855 = vmatprep.subr.mxu0 0.0
    %v856 = vand.u32 %v27, 4294901760
    %v857 = vsub.f32 %v27, %v856
    %v858 = vand.u32 %v857, 4294901760
    %859 = vmatpush1.msra.mxu0 %v858
    %860 = vmatprep.subr.mxu0 0.0
    %v861 = vand.u32 %v26, 4294901760
    %v862 = vsub.f32 %v26, %v861
    %v863 = vand.u32 %v862, 4294901760
    %864 = vmatpush1.msra.mxu0 %v863
    %865 = vmatprep.subr.mxu0 0.0
    %v866 = vand.u32 %v25, 4294901760
    %v867 = vsub.f32 %v25, %v866
    %v868 = vand.u32 %v867, 4294901760
    %869 = vmatpush1.msra.mxu0 %v868
    %870 = vmatprep.subr.mxu0 0.0
    %v871 = vand.u32 %v24, 4294901760
    %v872 = vsub.f32 %v24, %v871
    %v873 = vand.u32 %v872, 4294901760
    %874 = vmatpush1.msra.mxu0 %v873
    %875 = vmatprep.subr.mxu0 0.0
    %v876 = vand.u32 %v23, 4294901760
    %v877 = vsub.f32 %v23, %v876
    %v878 = vand.u32 %v877, 4294901760
    %879 = vmatpush1.msra.mxu0 %v878
    %880 = vmatprep.subr.mxu0 0.0
    %v881 = vand.u32 %v22, 4294901760
    %v882 = vsub.f32 %v22, %v881
    %v883 = vand.u32 %v882, 4294901760
    %884 = vmatpush1.msra.mxu0 %v883
    %885 = vmatprep.subr.mxu0 0.0
    %v886 = vand.u32 %v53, 4294901760
    %v887 = vsub.f32 %v53, %v886
    %v888 = vand.u32 %v887, 4294901760
    %889 = vmatpush2.msra.mxu0 %v888
    %890 = vmatprep.subr.mxu0 0.0
    %v891 = vand.u32 %v52, 4294901760
    %v892 = vsub.f32 %v52, %v891
    %v893 = vand.u32 %v892, 4294901760
    %894 = vmatpush2.msra.mxu0 %v893
    %895 = vmatprep.subr.mxu0 0.0
    %v896 = vand.u32 %v51, 4294901760
    %v897 = vsub.f32 %v51, %v896
    %v898 = vand.u32 %v897, 4294901760
    %899 = vmatpush2.msra.mxu0 %v898
    %900 = vmatprep.subr.mxu0 0.0
    %v901 = vand.u32 %v50, 4294901760
    %v902 = vsub.f32 %v50, %v901
    %v903 = vand.u32 %v902, 4294901760
    %904 = vmatpush2.msra.mxu0 %v903
    %905 = vmatprep.subr.mxu0 0.0
    %v906 = vand.u32 %v49, 4294901760
    %v907 = vsub.f32 %v49, %v906
    %v908 = vand.u32 %v907, 4294901760
    %909 = vmatpush2.msra.mxu0 %v908
    %910 = vmatprep.subr.mxu0 0.0
    %v911 = vand.u32 %v48, 4294901760
    %v912 = vsub.f32 %v48, %v911
    %v913 = vand.u32 %v912, 4294901760
    %914 = vmatpush2.msra.mxu0 %v913
    %915 = vmatprep.subr.mxu0 0.0
    %v916 = vand.u32 %v47, 4294901760
    %v917 = vsub.f32 %v47, %v916
    %v918 = vand.u32 %v917, 4294901760
    %919 = vmatpush2.msra.mxu0 %v918
    %920 = vmatprep.subr.mxu0 0.0
    %v921 = vand.u32 %v46, 4294901760
    %v922 = vsub.f32 %v46, %v921
    %v923 = vand.u32 %v922, 4294901760
    %924 = vmatpush2.msra.mxu0 %v923
    %925 = vmatprep.subr.mxu0 0.0
    %v926 = vand.u32 %v45, 4294901760
    %v927 = vsub.f32 %v45, %v926
    %v928 = vand.u32 %v927, 4294901760
    %929 = vmatpush2.msra.mxu0 %v928
    %930 = vmatprep.subr.mxu0 0.0
    %v931 = vand.u32 %v44, 4294901760
    %v932 = vsub.f32 %v44, %v931
    %v933 = vand.u32 %v932, 4294901760
    %934 = vmatpush2.msra.mxu0 %v933
    %935 = vmatprep.subr.mxu0 0.0
    %v936 = vand.u32 %v43, 4294901760
    %v937 = vsub.f32 %v43, %v936
    %v938 = vand.u32 %v937, 4294901760
    %939 = vmatpush2.msra.mxu0 %v938
    %940 = vmatprep.subr.mxu0 0.0
    %v941 = vand.u32 %v42, 4294901760
    %v942 = vsub.f32 %v42, %v941
    %v943 = vand.u32 %v942, 4294901760
    %944 = vmatpush2.msra.mxu0 %v943
    %945 = vmatprep.subr.mxu0 0.0
    %v946 = vand.u32 %v41, 4294901760
    %v947 = vsub.f32 %v41, %v946
    %v948 = vand.u32 %v947, 4294901760
    %949 = vmatpush2.msra.mxu0 %v948
    %950 = vmatprep.subr.mxu0 0.0
    %v951 = vand.u32 %v40, 4294901760
    %v952 = vsub.f32 %v40, %v951
    %v953 = vand.u32 %v952, 4294901760
    %954 = vmatpush2.msra.mxu0 %v953
    %955 = vmatprep.subr.mxu0 0.0
    %v956 = vand.u32 %v39, 4294901760
    %v957 = vsub.f32 %v39, %v956
    %v958 = vand.u32 %v957, 4294901760
    %959 = vmatpush2.msra.mxu0 %v958
    %960 = vmatprep.subr.mxu0 0.0
    %v961 = vand.u32 %v38, 4294901760
    %v962 = vsub.f32 %v38, %v961
    %v963 = vand.u32 %v962, 4294901760
    %964 = vmatpush2.msra.mxu0 %v963
    %v965 = vand.u32 %v168, 4294901760
    %966 = vmatprep.mubr.f32.mxu0 %v965
    %v967 = vand.u32 %v167, 4294901760
    %968 = vmatmul.mubr.f32.gmra.mxu0 %v967
    %v969 = vpop.f32.mrf.mxu0
    %v970 = vadd.f32 %v802, %v969
    %v971 = vpop.f32.mrf.mxu0
    %972 = vdwg.mxu0
    %973 = vmatprep.subr.mxu0 0.0
    %v974 = vand.u32 %v37, 4294901760
    %975 = vmatpush1.msra.mxu0 %v974
    %976 = vmatprep.subr.mxu0 0.0
    %v977 = vand.u32 %v36, 4294901760
    %978 = vmatpush1.msra.mxu0 %v977
    %979 = vmatprep.subr.mxu0 0.0
    %v980 = vand.u32 %v35, 4294901760
    %981 = vmatpush1.msra.mxu0 %v980
    %982 = vmatprep.subr.mxu0 0.0
    %v983 = vand.u32 %v34, 4294901760
    %984 = vmatpush1.msra.mxu0 %v983
    %985 = vmatprep.subr.mxu0 0.0
    %v986 = vand.u32 %v33, 4294901760
    %987 = vmatpush1.msra.mxu0 %v986
    %988 = vmatprep.subr.mxu0 0.0
    %v989 = vand.u32 %v32, 4294901760
    %990 = vmatpush1.msra.mxu0 %v989
    %991 = vmatprep.subr.mxu0 0.0
    %v992 = vand.u32 %v31, 4294901760
    %993 = vmatpush1.msra.mxu0 %v992
    %994 = vmatprep.subr.mxu0 0.0
    %v995 = vand.u32 %v30, 4294901760
    %996 = vmatpush1.msra.mxu0 %v995
    %997 = vmatprep.subr.mxu0 0.0
    %v998 = vand.u32 %v29, 4294901760
    %999 = vmatpush1.msra.mxu0 %v998
    %1000 = vmatprep.subr.mxu0 0.0
    %v1001 = vand.u32 %v28, 4294901760
    %1002 = vmatpush1.msra.mxu0 %v1001
    %1003 = vmatprep.subr.mxu0 0.0
    %v1004 = vand.u32 %v27, 4294901760
    %1005 = vmatpush1.msra.mxu0 %v1004
    %1006 = vmatprep.subr.mxu0 0.0
    %v1007 = vand.u32 %v26, 4294901760
    %1008 = vmatpush1.msra.mxu0 %v1007
    %1009 = vmatprep.subr.mxu0 0.0
    %v1010 = vand.u32 %v25, 4294901760
    %1011 = vmatpush1.msra.mxu0 %v1010
    %1012 = vmatprep.subr.mxu0 0.0
    %v1013 = vand.u32 %v24, 4294901760
    %1014 = vmatpush1.msra.mxu0 %v1013
    %1015 = vmatprep.subr.mxu0 0.0
    %v1016 = vand.u32 %v23, 4294901760
    %1017 = vmatpush1.msra.mxu0 %v1016
    %1018 = vmatprep.subr.mxu0 0.0
    %v1019 = vand.u32 %v22, 4294901760
    %1020 = vmatpush1.msra.mxu0 %v1019
    %1021 = vmatprep.subr.mxu0 0.0
    %v1022 = vand.u32 %v53, 4294901760
    %1023 = vmatpush2.msra.mxu0 %v1022
    %1024 = vmatprep.subr.mxu0 0.0
    %v1025 = vand.u32 %v52, 4294901760
    %1026 = vmatpush2.msra.mxu0 %v1025
    %1027 = vmatprep.subr.mxu0 0.0
    %v1028 = vand.u32 %v51, 4294901760
    %1029 = vmatpush2.msra.mxu0 %v1028
    %1030 = vmatprep.subr.mxu0 0.0
    %v1031 = vand.u32 %v50, 4294901760
    %1032 = vmatpush2.msra.mxu0 %v1031
    %1033 = vmatprep.subr.mxu0 0.0
    %v1034 = vand.u32 %v49, 4294901760
    %1035 = vmatpush2.msra.mxu0 %v1034
    %1036 = vmatprep.subr.mxu0 0.0
    %v1037 = vand.u32 %v48, 4294901760
    %1038 = vmatpush2.msra.mxu0 %v1037
    %1039 = vmatprep.subr.mxu0 0.0
    %v1040 = vand.u32 %v47, 4294901760
    %1041 = vmatpush2.msra.mxu0 %v1040
    %1042 = vmatprep.subr.mxu0 0.0
    %v1043 = vand.u32 %v46, 4294901760
    %1044 = vmatpush2.msra.mxu0 %v1043
    %1045 = vmatprep.subr.mxu0 0.0
    %v1046 = vand.u32 %v45, 4294901760
    %1047 = vmatpush2.msra.mxu0 %v1046
    %1048 = vmatprep.subr.mxu0 0.0
    %v1049 = vand.u32 %v44, 4294901760
    %1050 = vmatpush2.msra.mxu0 %v1049
    %1051 = vmatprep.subr.mxu0 0.0
    %v1052 = vand.u32 %v43, 4294901760
    %1053 = vmatpush2.msra.mxu0 %v1052
    %1054 = vmatprep.subr.mxu0 0.0
    %v1055 = vand.u32 %v42, 4294901760
    %1056 = vmatpush2.msra.mxu0 %v1055
    %1057 = vmatprep.subr.mxu0 0.0
    %v1058 = vand.u32 %v41, 4294901760
    %1059 = vmatpush2.msra.mxu0 %v1058
    %1060 = vmatprep.subr.mxu0 0.0
    %v1061 = vand.u32 %v40, 4294901760
    %1062 = vmatpush2.msra.mxu0 %v1061
    %1063 = vmatprep.subr.mxu0 0.0
    %v1064 = vand.u32 %v39, 4294901760
    %1065 = vmatpush2.msra.mxu0 %v1064
    %1066 = vmatprep.subr.mxu0 0.0
    %v1067 = vand.u32 %v38, 4294901760
    %1068 = vmatpush2.msra.mxu0 %v1067
    %v1069 = vand.u32 %v168, 4294901760
    %1070 = vmatprep.mubr.f32.mxu0 %v1069
    %v1071 = vand.u32 %v167, 4294901760
    %1072 = vmatmul.mubr.f32.gmra.mxu0 %v1071
    %v1073 = vpop.f32.mrf.mxu0
    %v1074 = vadd.f32 %v970, %v1073
    %v1075 = vpop.f32.mrf.mxu0
    %1076 = vdwg.mxu0
    %1077 = vmatprep.subr.mxu0 0.0
    %v1078 = vand.u32 %v69, 4294901760
    %1079 = vmatpush1.msra.mxu0 %v1078
    %1080 = vmatprep.subr.mxu0 0.0
    %v1081 = vand.u32 %v68, 4294901760
    %1082 = vmatpush1.msra.mxu0 %v1081
    %1083 = vmatprep.subr.mxu0 0.0
    %v1084 = vand.u32 %v67, 4294901760
    %1085 = vmatpush1.msra.mxu0 %v1084
    %1086 = vmatprep.subr.mxu0 0.0
    %v1087 = vand.u32 %v66, 4294901760
    %1088 = vmatpush1.msra.mxu0 %v1087
    %1089 = vmatprep.subr.mxu0 0.0
    %v1090 = vand.u32 %v65, 4294901760
    %1091 = vmatpush1.msra.mxu0 %v1090
    %1092 = vmatprep.subr.mxu0 0.0
    %v1093 = vand.u32 %v64, 4294901760
    %1094 = vmatpush1.msra.mxu0 %v1093
    %1095 = vmatprep.subr.mxu0 0.0
    %v1096 = vand.u32 %v63, 4294901760
    %1097 = vmatpush1.msra.mxu0 %v1096
    %1098 = vmatprep.subr.mxu0 0.0
    %v1099 = vand.u32 %v62, 4294901760
    %1100 = vmatpush1.msra.mxu0 %v1099
    %1101 = vmatprep.subr.mxu0 0.0
    %v1102 = vand.u32 %v61, 4294901760
    %1103 = vmatpush1.msra.mxu0 %v1102
    %1104 = vmatprep.subr.mxu0 0.0
    %v1105 = vand.u32 %v60, 4294901760
    %1106 = vmatpush1.msra.mxu0 %v1105
    %1107 = vmatprep.subr.mxu0 0.0
    %v1108 = vand.u32 %v59, 4294901760
    %1109 = vmatpush1.msra.mxu0 %v1108
    %1110 = vmatprep.subr.mxu0 0.0
    %v1111 = vand.u32 %v58, 4294901760
    %1112 = vmatpush1.msra.mxu0 %v1111
    %1113 = vmatprep.subr.mxu0 0.0
    %v1114 = vand.u32 %v57, 4294901760
    %1115 = vmatpush1.msra.mxu0 %v1114
    %1116 = vmatprep.subr.mxu0 0.0
    %v1117 = vand.u32 %v56, 4294901760
    %1118 = vmatpush1.msra.mxu0 %v1117
    %1119 = vmatprep.subr.mxu0 0.0
    %v1120 = vand.u32 %v55, 4294901760
    %1121 = vmatpush1.msra.mxu0 %v1120
    %1122 = vmatprep.subr.mxu0 0.0
    %v1123 = vand.u32 %v54, 4294901760
    %1124 = vmatpush1.msra.mxu0 %v1123
    %1125 = vmatprep.subr.mxu0 0.0
    %v1126 = vand.u32 %v85, 4294901760
    %1127 = vmatpush2.msra.mxu0 %v1126
    %1128 = vmatprep.subr.mxu0 0.0
    %v1129 = vand.u32 %v84, 4294901760
    %1130 = vmatpush2.msra.mxu0 %v1129
    %1131 = vmatprep.subr.mxu0 0.0
    %v1132 = vand.u32 %v83, 4294901760
    %1133 = vmatpush2.msra.mxu0 %v1132
    %1134 = vmatprep.subr.mxu0 0.0
    %v1135 = vand.u32 %v82, 4294901760
    %1136 = vmatpush2.msra.mxu0 %v1135
    %1137 = vmatprep.subr.mxu0 0.0
    %v1138 = vand.u32 %v81, 4294901760
    %1139 = vmatpush2.msra.mxu0 %v1138
    %1140 = vmatprep.subr.mxu0 0.0
    %v1141 = vand.u32 %v80, 4294901760
    %1142 = vmatpush2.msra.mxu0 %v1141
    %1143 = vmatprep.subr.mxu0 0.0
    %v1144 = vand.u32 %v79, 4294901760
    %1145 = vmatpush2.msra.mxu0 %v1144
    %1146 = vmatprep.subr.mxu0 0.0
    %v1147 = vand.u32 %v78, 4294901760
    %1148 = vmatpush2.msra.mxu0 %v1147
    %1149 = vmatprep.subr.mxu0 0.0
    %v1150 = vand.u32 %v77, 4294901760
    %1151 = vmatpush2.msra.mxu0 %v1150
    %1152 = vmatprep.subr.mxu0 0.0
    %v1153 = vand.u32 %v76, 4294901760
    %1154 = vmatpush2.msra.mxu0 %v1153
    %1155 = vmatprep.subr.mxu0 0.0
    %v1156 = vand.u32 %v75, 4294901760
    %1157 = vmatpush2.msra.mxu0 %v1156
    %1158 = vmatprep.subr.mxu0 0.0
    %v1159 = vand.u32 %v74, 4294901760
    %1160 = vmatpush2.msra.mxu0 %v1159
    %1161 = vmatprep.subr.mxu0 0.0
    %v1162 = vand.u32 %v73, 4294901760
    %1163 = vmatpush2.msra.mxu0 %v1162
    %1164 = vmatprep.subr.mxu0 0.0
    %v1165 = vand.u32 %v72, 4294901760
    %1166 = vmatpush2.msra.mxu0 %v1165
    %1167 = vmatprep.subr.mxu0 0.0
    %v1168 = vand.u32 %v71, 4294901760
    %1169 = vmatpush2.msra.mxu0 %v1168
    %1170 = vmatprep.subr.mxu0 0.0
    %v1171 = vand.u32 %v70, 4294901760
    %1172 = vmatpush2.msra.mxu0 %v1171
    %v1173 = vand.u32 %v170, 4294901760
    %v1174 = vsub.f32 %v170, %v1173
    %v1175 = vand.u32 %v1174, 4294901760
    %v1176 = vsub.f32 %v1174, %v1175
    %v1177 = vand.u32 %v1176, 4294901760
    %1178 = vmatprep.mubr.f32.mxu0 %v1177
    %v1179 = vand.u32 %v169, 4294901760
    %v1180 = vsub.f32 %v169, %v1179
    %v1181 = vand.u32 %v1180, 4294901760
    %v1182 = vsub.f32 %v1180, %v1181
    %v1183 = vand.u32 %v1182, 4294901760
    %1184 = vmatmul.mubr.f32.gmra.mxu0 %v1183
    %v1185 = vpop.f32.mrf.mxu0
    %v1186 = vadd.f32 %v1074, %v1185
    %v1187 = vpop.f32.mrf.mxu0
    %1188 = vdwg.mxu0
    %1189 = vmatprep.subr.mxu0 0.0
    %v1190 = vand.u32 %v69, 4294901760
    %v1191 = vsub.f32 %v69, %v1190
    %v1192 = vand.u32 %v1191, 4294901760
    %v1193 = vsub.f32 %v1191, %v1192
    %v1194 = vand.u32 %v1193, 4294901760
    %1195 = vmatpush1.msra.mxu0 %v1194
    %1196 = vmatprep.subr.mxu0 0.0
    %v1197 = vand.u32 %v68, 4294901760
    %v1198 = vsub.f32 %v68, %v1197
    %v1199 = vand.u32 %v1198, 4294901760
    %v1200 = vsub.f32 %v1198, %v1199
    %v1201 = vand.u32 %v1200, 4294901760
    %1202 = vmatpush1.msra.mxu0 %v1201
    %1203 = vmatprep.subr.mxu0 0.0
    %v1204 = vand.u32 %v67, 4294901760
    %v1205 = vsub.f32 %v67, %v1204
    %v1206 = vand.u32 %v1205, 4294901760
    %v1207 = vsub.f32 %v1205, %v1206
    %v1208 = vand.u32 %v1207, 4294901760
    %1209 = vmatpush1.msra.mxu0 %v1208
    %1210 = vmatprep.subr.mxu0 0.0
    %v1211 = vand.u32 %v66, 4294901760
    %v1212 = vsub.f32 %v66, %v1211
    %v1213 = vand.u32 %v1212, 4294901760
    %v1214 = vsub.f32 %v1212, %v1213
    %v1215 = vand.u32 %v1214, 4294901760
    %1216 = vmatpush1.msra.mxu0 %v1215
    %1217 = vmatprep.subr.mxu0 0.0
    %v1218 = vand.u32 %v65, 4294901760
    %v1219 = vsub.f32 %v65, %v1218
    %v1220 = vand.u32 %v1219, 4294901760
    %v1221 = vsub.f32 %v1219, %v1220
    %v1222 = vand.u32 %v1221, 4294901760
    %1223 = vmatpush1.msra.mxu0 %v1222
    %1224 = vmatprep.subr.mxu0 0.0
    %v1225 = vand.u32 %v64, 4294901760
    %v1226 = vsub.f32 %v64, %v1225
    %v1227 = vand.u32 %v1226, 4294901760
    %v1228 = vsub.f32 %v1226, %v1227
    %v1229 = vand.u32 %v1228, 4294901760
    %1230 = vmatpush1.msra.mxu0 %v1229
    %1231 = vmatprep.subr.mxu0 0.0
    %v1232 = vand.u32 %v63, 4294901760
    %v1233 = vsub.f32 %v63, %v1232
    %v1234 = vand.u32 %v1233, 4294901760
    %v1235 = vsub.f32 %v1233, %v1234
    %v1236 = vand.u32 %v1235, 4294901760
    %1237 = vmatpush1.msra.mxu0 %v1236
    %1238 = vmatprep.subr.mxu0 0.0
    %v1239 = vand.u32 %v62, 4294901760
    %v1240 = vsub.f32 %v62, %v1239
    %v1241 = vand.u32 %v1240, 4294901760
    %v1242 = vsub.f32 %v1240, %v1241
    %v1243 = vand.u32 %v1242, 4294901760
    %1244 = vmatpush1.msra.mxu0 %v1243
    %1245 = vmatprep.subr.mxu0 0.0
    %v1246 = vand.u32 %v61, 4294901760
    %v1247 = vsub.f32 %v61, %v1246
    %v1248 = vand.u32 %v1247, 4294901760
    %v1249 = vsub.f32 %v1247, %v1248
    %v1250 = vand.u32 %v1249, 4294901760
    %1251 = vmatpush1.msra.mxu0 %v1250
    %1252 = vmatprep.subr.mxu0 0.0
    %v1253 = vand.u32 %v60, 4294901760
    %v1254 = vsub.f32 %v60, %v1253
    %v1255 = vand.u32 %v1254, 4294901760
    %v1256 = vsub.f32 %v1254, %v1255
    %v1257 = vand.u32 %v1256, 4294901760
    %1258 = vmatpush1.msra.mxu0 %v1257
    %1259 = vmatprep.subr.mxu0 0.0
    %v1260 = vand.u32 %v59, 4294901760
    %v1261 = vsub.f32 %v59, %v1260
    %v1262 = vand.u32 %v1261, 4294901760
    %v1263 = vsub.f32 %v1261, %v1262
    %v1264 = vand.u32 %v1263, 4294901760
    %1265 = vmatpush1.msra.mxu0 %v1264
    %1266 = vmatprep.subr.mxu0 0.0
    %v1267 = vand.u32 %v58, 4294901760
    %v1268 = vsub.f32 %v58, %v1267
    %v1269 = vand.u32 %v1268, 4294901760
    %v1270 = vsub.f32 %v1268, %v1269
    %v1271 = vand.u32 %v1270, 4294901760
    %1272 = vmatpush1.msra.mxu0 %v1271
    %1273 = vmatprep.subr.mxu0 0.0
    %v1274 = vand.u32 %v57, 4294901760
    %v1275 = vsub.f32 %v57, %v1274
    %v1276 = vand.u32 %v1275, 4294901760
    %v1277 = vsub.f32 %v1275, %v1276
    %v1278 = vand.u32 %v1277, 4294901760
    %1279 = vmatpush1.msra.mxu0 %v1278
    %1280 = vmatprep.subr.mxu0 0.0
    %v1281 = vand.u32 %v56, 4294901760
    %v1282 = vsub.f32 %v56, %v1281
    %v1283 = vand.u32 %v1282, 4294901760
    %v1284 = vsub.f32 %v1282, %v1283
    %v1285 = vand.u32 %v1284, 4294901760
    %1286 = vmatpush1.msra.mxu0 %v1285
    %1287 = vmatprep.subr.mxu0 0.0
    %v1288 = vand.u32 %v55, 4294901760
    %v1289 = vsub.f32 %v55, %v1288
    %v1290 = vand.u32 %v1289, 4294901760
    %v1291 = vsub.f32 %v1289, %v1290
    %v1292 = vand.u32 %v1291, 4294901760
    %1293 = vmatpush1.msra.mxu0 %v1292
    %1294 = vmatprep.subr.mxu0 0.0
    %v1295 = vand.u32 %v54, 4294901760
    %v1296 = vsub.f32 %v54, %v1295
    %v1297 = vand.u32 %v1296, 4294901760
    %v1298 = vsub.f32 %v1296, %v1297
    %v1299 = vand.u32 %v1298, 4294901760
    %1300 = vmatpush1.msra.mxu0 %v1299
    %1301 = vmatprep.subr.mxu0 0.0
    %v1302 = vand.u32 %v85, 4294901760
    %v1303 = vsub.f32 %v85, %v1302
    %v1304 = vand.u32 %v1303, 4294901760
    %v1305 = vsub.f32 %v1303, %v1304
    %v1306 = vand.u32 %v1305, 4294901760
    %1307 = vmatpush2.msra.mxu0 %v1306
    %1308 = vmatprep.subr.mxu0 0.0
    %v1309 = vand.u32 %v84, 4294901760
    %v1310 = vsub.f32 %v84, %v1309
    %v1311 = vand.u32 %v1310, 4294901760
    %v1312 = vsub.f32 %v1310, %v1311
    %v1313 = vand.u32 %v1312, 4294901760
    %1314 = vmatpush2.msra.mxu0 %v1313
    %1315 = vmatprep.subr.mxu0 0.0
    %v1316 = vand.u32 %v83, 4294901760
    %v1317 = vsub.f32 %v83, %v1316
    %v1318 = vand.u32 %v1317, 4294901760
    %v1319 = vsub.f32 %v1317, %v1318
    %v1320 = vand.u32 %v1319, 4294901760
    %1321 = vmatpush2.msra.mxu0 %v1320
    %1322 = vmatprep.subr.mxu0 0.0
    %v1323 = vand.u32 %v82, 4294901760
    %v1324 = vsub.f32 %v82, %v1323
    %v1325 = vand.u32 %v1324, 4294901760
    %v1326 = vsub.f32 %v1324, %v1325
    %v1327 = vand.u32 %v1326, 4294901760
    %1328 = vmatpush2.msra.mxu0 %v1327
    %1329 = vmatprep.subr.mxu0 0.0
    %v1330 = vand.u32 %v81, 4294901760
    %v1331 = vsub.f32 %v81, %v1330
    %v1332 = vand.u32 %v1331, 4294901760
    %v1333 = vsub.f32 %v1331, %v1332
    %v1334 = vand.u32 %v1333, 4294901760
    %1335 = vmatpush2.msra.mxu0 %v1334
    %1336 = vmatprep.subr.mxu0 0.0
    %v1337 = vand.u32 %v80, 4294901760
    %v1338 = vsub.f32 %v80, %v1337
    %v1339 = vand.u32 %v1338, 4294901760
    %v1340 = vsub.f32 %v1338, %v1339
    %v1341 = vand.u32 %v1340, 4294901760
    %1342 = vmatpush2.msra.mxu0 %v1341
    %1343 = vmatprep.subr.mxu0 0.0
    %v1344 = vand.u32 %v79, 4294901760
    %v1345 = vsub.f32 %v79, %v1344
    %v1346 = vand.u32 %v1345, 4294901760
    %v1347 = vsub.f32 %v1345, %v1346
    %v1348 = vand.u32 %v1347, 4294901760
    %1349 = vmatpush2.msra.mxu0 %v1348
    %1350 = vmatprep.subr.mxu0 0.0
    %v1351 = vand.u32 %v78, 4294901760
    %v1352 = vsub.f32 %v78, %v1351
    %v1353 = vand.u32 %v1352, 4294901760
    %v1354 = vsub.f32 %v1352, %v1353
    %v1355 = vand.u32 %v1354, 4294901760
    %1356 = vmatpush2.msra.mxu0 %v1355
    %1357 = vmatprep.subr.mxu0 0.0
    %v1358 = vand.u32 %v77, 4294901760
    %v1359 = vsub.f32 %v77, %v1358
    %v1360 = vand.u32 %v1359, 4294901760
    %v1361 = vsub.f32 %v1359, %v1360
    %v1362 = vand.u32 %v1361, 4294901760
    %1363 = vmatpush2.msra.mxu0 %v1362
    %1364 = vmatprep.subr.mxu0 0.0
    %v1365 = vand.u32 %v76, 4294901760
    %v1366 = vsub.f32 %v76, %v1365
    %v1367 = vand.u32 %v1366, 4294901760
    %v1368 = vsub.f32 %v1366, %v1367
    %v1369 = vand.u32 %v1368, 4294901760
    %1370 = vmatpush2.msra.mxu0 %v1369
    %1371 = vmatprep.subr.mxu0 0.0
    %v1372 = vand.u32 %v75, 4294901760
    %v1373 = vsub.f32 %v75, %v1372
    %v1374 = vand.u32 %v1373, 4294901760
    %v1375 = vsub.f32 %v1373, %v1374
    %v1376 = vand.u32 %v1375, 4294901760
    %1377 = vmatpush2.msra.mxu0 %v1376
    %1378 = vmatprep.subr.mxu0 0.0
    %v1379 = vand.u32 %v74, 4294901760
    %v1380 = vsub.f32 %v74, %v1379
    %v1381 = vand.u32 %v1380, 4294901760
    %v1382 = vsub.f32 %v1380, %v1381
    %v1383 = vand.u32 %v1382, 4294901760
    %1384 = vmatpush2.msra.mxu0 %v1383
    %1385 = vmatprep.subr.mxu0 0.0
    %v1386 = vand.u32 %v73, 4294901760
    %v1387 = vsub.f32 %v73, %v1386
    %v1388 = vand.u32 %v1387, 4294901760
    %v1389 = vsub.f32 %v1387, %v1388
    %v1390 = vand.u32 %v1389, 4294901760
    %1391 = vmatpush2.msra.mxu0 %v1390
    %1392 = vmatprep.subr.mxu0 0.0
    %v1393 = vand.u32 %v72, 4294901760
    %v1394 = vsub.f32 %v72, %v1393
    %v1395 = vand.u32 %v1394, 4294901760
    %v1396 = vsub.f32 %v1394, %v1395
    %v1397 = vand.u32 %v1396, 4294901760
    %1398 = vmatpush2.msra.mxu0 %v1397
    %1399 = vmatprep.subr.mxu0 0.0
    %v1400 = vand.u32 %v71, 4294901760
    %v1401 = vsub.f32 %v71, %v1400
    %v1402 = vand.u32 %v1401, 4294901760
    %v1403 = vsub.f32 %v1401, %v1402
    %v1404 = vand.u32 %v1403, 4294901760
    %1405 = vmatpush2.msra.mxu0 %v1404
    %1406 = vmatprep.subr.mxu0 0.0
    %v1407 = vand.u32 %v70, 4294901760
    %v1408 = vsub.f32 %v70, %v1407
    %v1409 = vand.u32 %v1408, 4294901760
    %v1410 = vsub.f32 %v1408, %v1409
    %v1411 = vand.u32 %v1410, 4294901760
    %1412 = vmatpush2.msra.mxu0 %v1411
    %v1413 = vand.u32 %v170, 4294901760
    %1414 = vmatprep.mubr.f32.mxu0 %v1413
    %v1415 = vand.u32 %v169, 4294901760
    %1416 = vmatmul.mubr.f32.gmra.mxu0 %v1415
    %v1417 = vpop.f32.mrf.mxu0
    %v1418 = vadd.f32 %v1186, %v1417
    %v1419 = vpop.f32.mrf.mxu0
    %1420 = vdwg.mxu0
    %1421 = vmatprep.subr.mxu0 0.0
    %v1422 = vand.u32 %v69, 4294901760
    %v1423 = vsub.f32 %v69, %v1422
    %1424 = vmatpush1.msra.mxu0 %v1423
    %1425 = vmatprep.subr.mxu0 0.0
    %v1426 = vand.u32 %v68, 4294901760
    %v1427 = vsub.f32 %v68, %v1426
    %1428 = vmatpush1.msra.mxu0 %v1427
    %1429 = vmatprep.subr.mxu0 0.0
    %v1430 = vand.u32 %v67, 4294901760
    %v1431 = vsub.f32 %v67, %v1430
    %1432 = vmatpush1.msra.mxu0 %v1431
    %1433 = vmatprep.subr.mxu0 0.0
    %v1434 = vand.u32 %v66, 4294901760
    %v1435 = vsub.f32 %v66, %v1434
    %1436 = vmatpush1.msra.mxu0 %v1435
    %1437 = vmatprep.subr.mxu0 0.0
    %v1438 = vand.u32 %v65, 4294901760
    %v1439 = vsub.f32 %v65, %v1438
    %1440 = vmatpush1.msra.mxu0 %v1439
    %1441 = vmatprep.subr.mxu0 0.0
    %v1442 = vand.u32 %v64, 4294901760
    %v1443 = vsub.f32 %v64, %v1442
    %1444 = vmatpush1.msra.mxu0 %v1443
    %1445 = vmatprep.subr.mxu0 0.0
    %v1446 = vand.u32 %v63, 4294901760
    %v1447 = vsub.f32 %v63, %v1446
    %1448 = vmatpush1.msra.mxu0 %v1447
    %1449 = vmatprep.subr.mxu0 0.0
    %v1450 = vand.u32 %v62, 4294901760
    %v1451 = vsub.f32 %v62, %v1450
    %1452 = vmatpush1.msra.mxu0 %v1451
    %1453 = vmatprep.subr.mxu0 0.0
    %v1454 = vand.u32 %v61, 4294901760
    %v1455 = vsub.f32 %v61, %v1454
    %1456 = vmatpush1.msra.mxu0 %v1455
    %1457 = vmatprep.subr.mxu0 0.0
    %v1458 = vand.u32 %v60, 4294901760
    %v1459 = vsub.f32 %v60, %v1458
    %1460 = vmatpush1.msra.mxu0 %v1459
    %1461 = vmatprep.subr.mxu0 0.0
    %v1462 = vand.u32 %v59, 4294901760
    %v1463 = vsub.f32 %v59, %v1462
    %1464 = vmatpush1.msra.mxu0 %v1463
    %1465 = vmatprep.subr.mxu0 0.0
    %v1466 = vand.u32 %v58, 4294901760
    %v1467 = vsub.f32 %v58, %v1466
    %1468 = vmatpush1.msra.mxu0 %v1467
    %1469 = vmatprep.subr.mxu0 0.0
    %v1470 = vand.u32 %v57, 4294901760
    %v1471 = vsub.f32 %v57, %v1470
    %1472 = vmatpush1.msra.mxu0 %v1471
    %1473 = vmatprep.subr.mxu0 0.0
    %v1474 = vand.u32 %v56, 4294901760
    %v1475 = vsub.f32 %v56, %v1474
    %1476 = vmatpush1.msra.mxu0 %v1475
    %1477 = vmatprep.subr.mxu0 0.0
    %v1478 = vand.u32 %v55, 4294901760
    %v1479 = vsub.f32 %v55, %v1478
    %1480 = vmatpush1.msra.mxu0 %v1479
    %1481 = vmatprep.subr.mxu0 0.0
    %v1482 = vand.u32 %v54, 4294901760
    %v1483 = vsub.f32 %v54, %v1482
    %1484 = vmatpush1.msra.mxu0 %v1483
    %1485 = vmatprep.subr.mxu0 0.0
    %v1486 = vand.u32 %v85, 4294901760
    %v1487 = vsub.f32 %v85, %v1486
    %1488 = vmatpush2.msra.mxu0 %v1487
    %1489 = vmatprep.subr.mxu0 0.0
    %v1490 = vand.u32 %v84, 4294901760
    %v1491 = vsub.f32 %v84, %v1490
    %1492 = vmatpush2.msra.mxu0 %v1491
    %1493 = vmatprep.subr.mxu0 0.0
    %v1494 = vand.u32 %v83, 4294901760
    %v1495 = vsub.f32 %v83, %v1494
    %1496 = vmatpush2.msra.mxu0 %v1495
    %1497 = vmatprep.subr.mxu0 0.0
    %v1498 = vand.u32 %v82, 4294901760
    %v1499 = vsub.f32 %v82, %v1498
    %1500 = vmatpush2.msra.mxu0 %v1499
    %1501 = vmatprep.subr.mxu0 0.0
    %v1502 = vand.u32 %v81, 4294901760
    %v1503 = vsub.f32 %v81, %v1502
    %1504 = vmatpush2.msra.mxu0 %v1503
    %1505 = vmatprep.subr.mxu0 0.0
    %v1506 = vand.u32 %v80, 4294901760
    %v1507 = vsub.f32 %v80, %v1506
    %1508 = vmatpush2.msra.mxu0 %v1507
    %1509 = vmatprep.subr.mxu0 0.0
    %v1510 = vand.u32 %v79, 4294901760
    %v1511 = vsub.f32 %v79, %v1510
    %1512 = vmatpush2.msra.mxu0 %v1511
    %1513 = vmatprep.subr.mxu0 0.0
    %v1514 = vand.u32 %v78, 4294901760
    %v1515 = vsub.f32 %v78, %v1514
    %1516 = vmatpush2.msra.mxu0 %v1515
    %1517 = vmatprep.subr.mxu0 0.0
    %v1518 = vand.u32 %v77, 4294901760
    %v1519 = vsub.f32 %v77, %v1518
    %1520 = vmatpush2.msra.mxu0 %v1519
    %1521 = vmatprep.subr.mxu0 0.0
    %v1522 = vand.u32 %v76, 4294901760
    %v1523 = vsub.f32 %v76, %v1522
    %1524 = vmatpush2.msra.mxu0 %v1523
    %1525 = vmatprep.subr.mxu0 0.0
    %v1526 = vand.u32 %v75, 4294901760
    %v1527 = vsub.f32 %v75, %v1526
    %1528 = vmatpush2.msra.mxu0 %v1527
    %1529 = vmatprep.subr.mxu0 0.0
    %v1530 = vand.u32 %v74, 4294901760
    %v1531 = vsub.f32 %v74, %v1530
    %1532 = vmatpush2.msra.mxu0 %v1531
    %1533 = vmatprep.subr.mxu0 0.0
    %v1534 = vand.u32 %v73, 4294901760
    %v1535 = vsub.f32 %v73, %v1534
    %1536 = vmatpush2.msra.mxu0 %v1535
    %1537 = vmatprep.subr.mxu0 0.0
    %v1538 = vand.u32 %v72, 4294901760
    %v1539 = vsub.f32 %v72, %v1538
    %1540 = vmatpush2.msra.mxu0 %v1539
    %1541 = vmatprep.subr.mxu0 0.0
    %v1542 = vand.u32 %v71, 4294901760
    %v1543 = vsub.f32 %v71, %v1542
    %1544 = vmatpush2.msra.mxu0 %v1543
    %1545 = vmatprep.subr.mxu0 0.0
    %v1546 = vand.u32 %v70, 4294901760
    %v1547 = vsub.f32 %v70, %v1546
    %1548 = vmatpush2.msra.mxu0 %v1547
    %v1549 = vand.u32 %v170, 4294901760
    %v1550 = vsub.f32 %v170, %v1549
    %1551 = vmatprep.mubr.f32.mxu0 %v1550
    %v1552 = vand.u32 %v169, 4294901760
    %v1553 = vsub.f32 %v169, %v1552
    %1554 = vmatmul.mubr.f32.gmra.mxu0 %v1553
    %v1555 = vpop.f32.mrf.mxu0
    %v1556 = vadd.f32 %v1418, %v1555
    %v1557 = vpop.f32.mrf.mxu0
    %1558 = vdwg.mxu0
    %1559 = vmatprep.subr.mxu0 0.0
    %v1560 = vand.u32 %v69, 4294901760
    %1561 = vmatpush1.msra.mxu0 %v1560
    %1562 = vmatprep.subr.mxu0 0.0
    %v1563 = vand.u32 %v68, 4294901760
    %1564 = vmatpush1.msra.mxu0 %v1563
    %1565 = vmatprep.subr.mxu0 0.0
    %v1566 = vand.u32 %v67, 4294901760
    %1567 = vmatpush1.msra.mxu0 %v1566
    %1568 = vmatprep.subr.mxu0 0.0
    %v1569 = vand.u32 %v66, 4294901760
    %1570 = vmatpush1.msra.mxu0 %v1569
    %1571 = vmatprep.subr.mxu0 0.0
    %v1572 = vand.u32 %v65, 4294901760
    %1573 = vmatpush1.msra.mxu0 %v1572
    %1574 = vmatprep.subr.mxu0 0.0
    %v1575 = vand.u32 %v64, 4294901760
    %1576 = vmatpush1.msra.mxu0 %v1575
    %1577 = vmatprep.subr.mxu0 0.0
    %v1578 = vand.u32 %v63, 4294901760
    %1579 = vmatpush1.msra.mxu0 %v1578
    %1580 = vmatprep.subr.mxu0 0.0
    %v1581 = vand.u32 %v62, 4294901760
    %1582 = vmatpush1.msra.mxu0 %v1581
    %1583 = vmatprep.subr.mxu0 0.0
    %v1584 = vand.u32 %v61, 4294901760
    %1585 = vmatpush1.msra.mxu0 %v1584
    %1586 = vmatprep.subr.mxu0 0.0
    %v1587 = vand.u32 %v60, 4294901760
    %1588 = vmatpush1.msra.mxu0 %v1587
    %1589 = vmatprep.subr.mxu0 0.0
    %v1590 = vand.u32 %v59, 4294901760
    %1591 = vmatpush1.msra.mxu0 %v1590
    %1592 = vmatprep.subr.mxu0 0.0
    %v1593 = vand.u32 %v58, 4294901760
    %1594 = vmatpush1.msra.mxu0 %v1593
    %1595 = vmatprep.subr.mxu0 0.0
    %v1596 = vand.u32 %v57, 4294901760
    %1597 = vmatpush1.msra.mxu0 %v1596
    %1598 = vmatprep.subr.mxu0 0.0
    %v1599 = vand.u32 %v56, 4294901760
    %1600 = vmatpush1.msra.mxu0 %v1599
    %1601 = vmatprep.subr.mxu0 0.0
    %v1602 = vand.u32 %v55, 4294901760
    %1603 = vmatpush1.msra.mxu0 %v1602
    %1604 = vmatprep.subr.mxu0 0.0
    %v1605 = vand.u32 %v54, 4294901760
    %1606 = vmatpush1.msra.mxu0 %v1605
    %1607 = vmatprep.subr.mxu0 0.0
    %v1608 = vand.u32 %v85, 4294901760
    %1609 = vmatpush2.msra.mxu0 %v1608
    %1610 = vmatprep.subr.mxu0 0.0
    %v1611 = vand.u32 %v84, 4294901760
    %1612 = vmatpush2.msra.mxu0 %v1611
    %1613 = vmatprep.subr.mxu0 0.0
    %v1614 = vand.u32 %v83, 4294901760
    %1615 = vmatpush2.msra.mxu0 %v1614
    %1616 = vmatprep.subr.mxu0 0.0
    %v1617 = vand.u32 %v82, 4294901760
    %1618 = vmatpush2.msra.mxu0 %v1617
    %1619 = vmatprep.subr.mxu0 0.0
    %v1620 = vand.u32 %v81, 4294901760
    %1621 = vmatpush2.msra.mxu0 %v1620
    %1622 = vmatprep.subr.mxu0 0.0
    %v1623 = vand.u32 %v80, 4294901760
    %1624 = vmatpush2.msra.mxu0 %v1623
    %1625 = vmatprep.subr.mxu0 0.0
    %v1626 = vand.u32 %v79, 4294901760
    %1627 = vmatpush2.msra.mxu0 %v1626
    %1628 = vmatprep.subr.mxu0 0.0
    %v1629 = vand.u32 %v78, 4294901760
    %1630 = vmatpush2.msra.mxu0 %v1629
    %1631 = vmatprep.subr.mxu0 0.0
    %v1632 = vand.u32 %v77, 4294901760
    %1633 = vmatpush2.msra.mxu0 %v1632
    %1634 = vmatprep.subr.mxu0 0.0
    %v1635 = vand.u32 %v76, 4294901760
    %1636 = vmatpush2.msra.mxu0 %v1635
    %1637 = vmatprep.subr.mxu0 0.0
    %v1638 = vand.u32 %v75, 4294901760
    %1639 = vmatpush2.msra.mxu0 %v1638
    %1640 = vmatprep.subr.mxu0 0.0
    %v1641 = vand.u32 %v74, 4294901760
    %1642 = vmatpush2.msra.mxu0 %v1641
    %1643 = vmatprep.subr.mxu0 0.0
    %v1644 = vand.u32 %v73, 4294901760
    %1645 = vmatpush2.msra.mxu0 %v1644
    %1646 = vmatprep.subr.mxu0 0.0
    %v1647 = vand.u32 %v72, 4294901760
    %1648 = vmatpush2.msra.mxu0 %v1647
    %1649 = vmatprep.subr.mxu0 0.0
    %v1650 = vand.u32 %v71, 4294901760
    %1651 = vmatpush2.msra.mxu0 %v1650
    %1652 = vmatprep.subr.mxu0 0.0
    %v1653 = vand.u32 %v70, 4294901760
    %1654 = vmatpush2.msra.mxu0 %v1653
    %v1655 = vand.u32 %v170, 4294901760
    %v1656 = vsub.f32 %v170, %v1655
    %v1657 = vand.u32 %v1656, 4294901760
    %1658 = vmatprep.mubr.f32.mxu0 %v1657
    %v1659 = vand.u32 %v169, 4294901760
    %v1660 = vsub.f32 %v169, %v1659
    %v1661 = vand.u32 %v1660, 4294901760
    %1662 = vmatmul.mubr.f32.gmra.mxu0 %v1661
    %v1663 = vpop.f32.mrf.mxu0
    %v1664 = vadd.f32 %v1556, %v1663
    %v1665 = vpop.f32.mrf.mxu0
    %1666 = vdwg.mxu0
    %1667 = vmatprep.subr.mxu0 0.0
    %v1668 = vand.u32 %v69, 4294901760
    %v1669 = vsub.f32 %v69, %v1668
    %v1670 = vand.u32 %v1669, 4294901760
    %1671 = vmatpush1.msra.mxu0 %v1670
    %1672 = vmatprep.subr.mxu0 0.0
    %v1673 = vand.u32 %v68, 4294901760
    %v1674 = vsub.f32 %v68, %v1673
    %v1675 = vand.u32 %v1674, 4294901760
    %1676 = vmatpush1.msra.mxu0 %v1675
    %1677 = vmatprep.subr.mxu0 0.0
    %v1678 = vand.u32 %v67, 4294901760
    %v1679 = vsub.f32 %v67, %v1678
    %v1680 = vand.u32 %v1679, 4294901760
    %1681 = vmatpush1.msra.mxu0 %v1680
    %1682 = vmatprep.subr.mxu0 0.0
    %v1683 = vand.u32 %v66, 4294901760
    %v1684 = vsub.f32 %v66, %v1683
    %v1685 = vand.u32 %v1684, 4294901760
    %1686 = vmatpush1.msra.mxu0 %v1685
    %1687 = vmatprep.subr.mxu0 0.0
    %v1688 = vand.u32 %v65, 4294901760
    %v1689 = vsub.f32 %v65, %v1688
    %v1690 = vand.u32 %v1689, 4294901760
    %1691 = vmatpush1.msra.mxu0 %v1690
    %1692 = vmatprep.subr.mxu0 0.0
    %v1693 = vand.u32 %v64, 4294901760
    %v1694 = vsub.f32 %v64, %v1693
    %v1695 = vand.u32 %v1694, 4294901760
    %1696 = vmatpush1.msra.mxu0 %v1695
    %1697 = vmatprep.subr.mxu0 0.0
    %v1698 = vand.u32 %v63, 4294901760
    %v1699 = vsub.f32 %v63, %v1698
    %v1700 = vand.u32 %v1699, 4294901760
    %1701 = vmatpush1.msra.mxu0 %v1700
    %1702 = vmatprep.subr.mxu0 0.0
    %v1703 = vand.u32 %v62, 4294901760
    %v1704 = vsub.f32 %v62, %v1703
    %v1705 = vand.u32 %v1704, 4294901760
    %1706 = vmatpush1.msra.mxu0 %v1705
    %1707 = vmatprep.subr.mxu0 0.0
    %v1708 = vand.u32 %v61, 4294901760
    %v1709 = vsub.f32 %v61, %v1708
    %v1710 = vand.u32 %v1709, 4294901760
    %1711 = vmatpush1.msra.mxu0 %v1710
    %1712 = vmatprep.subr.mxu0 0.0
    %v1713 = vand.u32 %v60, 4294901760
    %v1714 = vsub.f32 %v60, %v1713
    %v1715 = vand.u32 %v1714, 4294901760
    %1716 = vmatpush1.msra.mxu0 %v1715
    %1717 = vmatprep.subr.mxu0 0.0
    %v1718 = vand.u32 %v59, 4294901760
    %v1719 = vsub.f32 %v59, %v1718
    %v1720 = vand.u32 %v1719, 4294901760
    %1721 = vmatpush1.msra.mxu0 %v1720
    %1722 = vmatprep.subr.mxu0 0.0
    %v1723 = vand.u32 %v58, 4294901760
    %v1724 = vsub.f32 %v58, %v1723
    %v1725 = vand.u32 %v1724, 4294901760
    %1726 = vmatpush1.msra.mxu0 %v1725
    %1727 = vmatprep.subr.mxu0 0.0
    %v1728 = vand.u32 %v57, 4294901760
    %v1729 = vsub.f32 %v57, %v1728
    %v1730 = vand.u32 %v1729, 4294901760
    %1731 = vmatpush1.msra.mxu0 %v1730
    %1732 = vmatprep.subr.mxu0 0.0
    %v1733 = vand.u32 %v56, 4294901760
    %v1734 = vsub.f32 %v56, %v1733
    %v1735 = vand.u32 %v1734, 4294901760
    %1736 = vmatpush1.msra.mxu0 %v1735
    %1737 = vmatprep.subr.mxu0 0.0
    %v1738 = vand.u32 %v55, 4294901760
    %v1739 = vsub.f32 %v55, %v1738
    %v1740 = vand.u32 %v1739, 4294901760
    %1741 = vmatpush1.msra.mxu0 %v1740
    %1742 = vmatprep.subr.mxu0 0.0
    %v1743 = vand.u32 %v54, 4294901760
    %v1744 = vsub.f32 %v54, %v1743
    %v1745 = vand.u32 %v1744, 4294901760
    %1746 = vmatpush1.msra.mxu0 %v1745
    %1747 = vmatprep.subr.mxu0 0.0
    %v1748 = vand.u32 %v85, 4294901760
    %v1749 = vsub.f32 %v85, %v1748
    %v1750 = vand.u32 %v1749, 4294901760
    %1751 = vmatpush2.msra.mxu0 %v1750
    %1752 = vmatprep.subr.mxu0 0.0
    %v1753 = vand.u32 %v84, 4294901760
    %v1754 = vsub.f32 %v84, %v1753
    %v1755 = vand.u32 %v1754, 4294901760
    %1756 = vmatpush2.msra.mxu0 %v1755
    %1757 = vmatprep.subr.mxu0 0.0
    %v1758 = vand.u32 %v83, 4294901760
    %v1759 = vsub.f32 %v83, %v1758
    %v1760 = vand.u32 %v1759, 4294901760
    %1761 = vmatpush2.msra.mxu0 %v1760
    %1762 = vmatprep.subr.mxu0 0.0
    %v1763 = vand.u32 %v82, 4294901760
    %v1764 = vsub.f32 %v82, %v1763
    %v1765 = vand.u32 %v1764, 4294901760
    %1766 = vmatpush2.msra.mxu0 %v1765
    %1767 = vmatprep.subr.mxu0 0.0
    %v1768 = vand.u32 %v81, 4294901760
    %v1769 = vsub.f32 %v81, %v1768
    %v1770 = vand.u32 %v1769, 4294901760
    %1771 = vmatpush2.msra.mxu0 %v1770
    %1772 = vmatprep.subr.mxu0 0.0
    %v1773 = vand.u32 %v80, 4294901760
    %v1774 = vsub.f32 %v80, %v1773
    %v1775 = vand.u32 %v1774, 4294901760
    %1776 = vmatpush2.msra.mxu0 %v1775
    %1777 = vmatprep.subr.mxu0 0.0
    %v1778 = vand.u32 %v79, 4294901760
    %v1779 = vsub.f32 %v79, %v1778
    %v1780 = vand.u32 %v1779, 4294901760
    %1781 = vmatpush2.msra.mxu0 %v1780
    %1782 = vmatprep.subr.mxu0 0.0
    %v1783 = vand.u32 %v78, 4294901760
    %v1784 = vsub.f32 %v78, %v1783
    %v1785 = vand.u32 %v1784, 4294901760
    %1786 = vmatpush2.msra.mxu0 %v1785
    %1787 = vmatprep.subr.mxu0 0.0
    %v1788 = vand.u32 %v77, 4294901760
    %v1789 = vsub.f32 %v77, %v1788
    %v1790 = vand.u32 %v1789, 4294901760
    %1791 = vmatpush2.msra.mxu0 %v1790
    %1792 = vmatprep.subr.mxu0 0.0
    %v1793 = vand.u32 %v76, 4294901760
    %v1794 = vsub.f32 %v76, %v1793
    %v1795 = vand.u32 %v1794, 4294901760
    %1796 = vmatpush2.msra.mxu0 %v1795
    %1797 = vmatprep.subr.mxu0 0.0
    %v1798 = vand.u32 %v75, 4294901760
    %v1799 = vsub.f32 %v75, %v1798
    %v1800 = vand.u32 %v1799, 4294901760
    %1801 = vmatpush2.msra.mxu0 %v1800
    %1802 = vmatprep.subr.mxu0 0.0
    %v1803 = vand.u32 %v74, 4294901760
    %v1804 = vsub.f32 %v74, %v1803
    %v1805 = vand.u32 %v1804, 4294901760
    %1806 = vmatpush2.msra.mxu0 %v1805
    %1807 = vmatprep.subr.mxu0 0.0
    %v1808 = vand.u32 %v73, 4294901760
    %v1809 = vsub.f32 %v73, %v1808
    %v1810 = vand.u32 %v1809, 4294901760
    %1811 = vmatpush2.msra.mxu0 %v1810
    %1812 = vmatprep.subr.mxu0 0.0
    %v1813 = vand.u32 %v72, 4294901760
    %v1814 = vsub.f32 %v72, %v1813
    %v1815 = vand.u32 %v1814, 4294901760
    %1816 = vmatpush2.msra.mxu0 %v1815
    %1817 = vmatprep.subr.mxu0 0.0
    %v1818 = vand.u32 %v71, 4294901760
    %v1819 = vsub.f32 %v71, %v1818
    %v1820 = vand.u32 %v1819, 4294901760
    %1821 = vmatpush2.msra.mxu0 %v1820
    %1822 = vmatprep.subr.mxu0 0.0
    %v1823 = vand.u32 %v70, 4294901760
    %v1824 = vsub.f32 %v70, %v1823
    %v1825 = vand.u32 %v1824, 4294901760
    %1826 = vmatpush2.msra.mxu0 %v1825
    %v1827 = vand.u32 %v170, 4294901760
    %1828 = vmatprep.mubr.f32.mxu0 %v1827
    %v1829 = vand.u32 %v169, 4294901760
    %1830 = vmatmul.mubr.f32.gmra.mxu0 %v1829
    %v1831 = vpop.f32.mrf.mxu0
    %v1832 = vadd.f32 %v1664, %v1831
    %v1833 = vpop.f32.mrf.mxu0
    %1834 = vdwg.mxu0
    %1835 = vmatprep.subr.mxu0 0.0
    %v1836 = vand.u32 %v69, 4294901760
    %1837 = vmatpush1.msra.mxu0 %v1836
    %1838 = vmatprep.subr.mxu0 0.0
    %v1839 = vand.u32 %v68, 4294901760
    %1840 = vmatpush1.msra.mxu0 %v1839
    %1841 = vmatprep.subr.mxu0 0.0
    %v1842 = vand.u32 %v67, 4294901760
    %1843 = vmatpush1.msra.mxu0 %v1842
    %1844 = vmatprep.subr.mxu0 0.0
    %v1845 = vand.u32 %v66, 4294901760
    %1846 = vmatpush1.msra.mxu0 %v1845
    %1847 = vmatprep.subr.mxu0 0.0
    %v1848 = vand.u32 %v65, 4294901760
    %1849 = vmatpush1.msra.mxu0 %v1848
    %1850 = vmatprep.subr.mxu0 0.0
    %v1851 = vand.u32 %v64, 4294901760
    %1852 = vmatpush1.msra.mxu0 %v1851
    %1853 = vmatprep.subr.mxu0 0.0
    %v1854 = vand.u32 %v63, 4294901760
    %1855 = vmatpush1.msra.mxu0 %v1854
    %1856 = vmatprep.subr.mxu0 0.0
    %v1857 = vand.u32 %v62, 4294901760
    %1858 = vmatpush1.msra.mxu0 %v1857
    %1859 = vmatprep.subr.mxu0 0.0
    %v1860 = vand.u32 %v61, 4294901760
    %1861 = vmatpush1.msra.mxu0 %v1860
    %1862 = vmatprep.subr.mxu0 0.0
    %v1863 = vand.u32 %v60, 4294901760
    %1864 = vmatpush1.msra.mxu0 %v1863
    %1865 = vmatprep.subr.mxu0 0.0
    %v1866 = vand.u32 %v59, 4294901760
    %1867 = vmatpush1.msra.mxu0 %v1866
    %1868 = vmatprep.subr.mxu0 0.0
    %v1869 = vand.u32 %v58, 4294901760
    %1870 = vmatpush1.msra.mxu0 %v1869
    %1871 = vmatprep.subr.mxu0 0.0
    %v1872 = vand.u32 %v57, 4294901760
    %1873 = vmatpush1.msra.mxu0 %v1872
    %1874 = vmatprep.subr.mxu0 0.0
    %v1875 = vand.u32 %v56, 4294901760
    %1876 = vmatpush1.msra.mxu0 %v1875
    %1877 = vmatprep.subr.mxu0 0.0
    %v1878 = vand.u32 %v55, 4294901760
    %1879 = vmatpush1.msra.mxu0 %v1878
    %1880 = vmatprep.subr.mxu0 0.0
    %v1881 = vand.u32 %v54, 4294901760
    %1882 = vmatpush1.msra.mxu0 %v1881
    %1883 = vmatprep.subr.mxu0 0.0
    %v1884 = vand.u32 %v85, 4294901760
    %1885 = vmatpush2.msra.mxu0 %v1884
    %1886 = vmatprep.subr.mxu0 0.0
    %v1887 = vand.u32 %v84, 4294901760
    %1888 = vmatpush2.msra.mxu0 %v1887
    %1889 = vmatprep.subr.mxu0 0.0
    %v1890 = vand.u32 %v83, 4294901760
    %1891 = vmatpush2.msra.mxu0 %v1890
    %1892 = vmatprep.subr.mxu0 0.0
    %v1893 = vand.u32 %v82, 4294901760
    %1894 = vmatpush2.msra.mxu0 %v1893
    %1895 = vmatprep.subr.mxu0 0.0
    %v1896 = vand.u32 %v81, 4294901760
    %1897 = vmatpush2.msra.mxu0 %v1896
    %1898 = vmatprep.subr.mxu0 0.0
    %v1899 = vand.u32 %v80, 4294901760
    %1900 = vmatpush2.msra.mxu0 %v1899
    %1901 = vmatprep.subr.mxu0 0.0
    %v1902 = vand.u32 %v79, 4294901760
    %1903 = vmatpush2.msra.mxu0 %v1902
    %1904 = vmatprep.subr.mxu0 0.0
    %v1905 = vand.u32 %v78, 4294901760
    %1906 = vmatpush2.msra.mxu0 %v1905
    %1907 = vmatprep.subr.mxu0 0.0
    %v1908 = vand.u32 %v77, 4294901760
    %1909 = vmatpush2.msra.mxu0 %v1908
    %1910 = vmatprep.subr.mxu0 0.0
    %v1911 = vand.u32 %v76, 4294901760
    %1912 = vmatpush2.msra.mxu0 %v1911
    %1913 = vmatprep.subr.mxu0 0.0
    %v1914 = vand.u32 %v75, 4294901760
    %1915 = vmatpush2.msra.mxu0 %v1914
    %1916 = vmatprep.subr.mxu0 0.0
    %v1917 = vand.u32 %v74, 4294901760
    %1918 = vmatpush2.msra.mxu0 %v1917
    %1919 = vmatprep.subr.mxu0 0.0
    %v1920 = vand.u32 %v73, 4294901760
    %1921 = vmatpush2.msra.mxu0 %v1920
    %1922 = vmatprep.subr.mxu0 0.0
    %v1923 = vand.u32 %v72, 4294901760
    %1924 = vmatpush2.msra.mxu0 %v1923
    %1925 = vmatprep.subr.mxu0 0.0
    %v1926 = vand.u32 %v71, 4294901760
    %1927 = vmatpush2.msra.mxu0 %v1926
    %1928 = vmatprep.subr.mxu0 0.0
    %v1929 = vand.u32 %v70, 4294901760
    %1930 = vmatpush2.msra.mxu0 %v1929
    %v1931 = vand.u32 %v170, 4294901760
    %1932 = vmatprep.mubr.f32.mxu0 %v1931
    %v1933 = vand.u32 %v169, 4294901760
    %1934 = vmatmul.mubr.f32.gmra.mxu0 %v1933
    %v1935 = vpop.f32.mrf.mxu0
    %v1936 = vadd.f32 %v1832, %v1935
    %v1937 = vpop.f32.mrf.mxu0
    %1938 = vdwg.mxu0
    %1939 = vmatprep.subr.mxu0 0.0
    %v1940 = vand.u32 %v101, 4294901760
    %1941 = vmatpush1.msra.mxu0 %v1940
    %1942 = vmatprep.subr.mxu0 0.0
    %v1943 = vand.u32 %v100, 4294901760
    %1944 = vmatpush1.msra.mxu0 %v1943
    %1945 = vmatprep.subr.mxu0 0.0
    %v1946 = vand.u32 %v99, 4294901760
    %1947 = vmatpush1.msra.mxu0 %v1946
    %1948 = vmatprep.subr.mxu0 0.0
    %v1949 = vand.u32 %v98, 4294901760
    %1950 = vmatpush1.msra.mxu0 %v1949
    %1951 = vmatprep.subr.mxu0 0.0
    %v1952 = vand.u32 %v97, 4294901760
    %1953 = vmatpush1.msra.mxu0 %v1952
    %1954 = vmatprep.subr.mxu0 0.0
    %v1955 = vand.u32 %v96, 4294901760
    %1956 = vmatpush1.msra.mxu0 %v1955
    %1957 = vmatprep.subr.mxu0 0.0
    %v1958 = vand.u32 %v95, 4294901760
    %1959 = vmatpush1.msra.mxu0 %v1958
    %1960 = vmatprep.subr.mxu0 0.0
    %v1961 = vand.u32 %v94, 4294901760
    %1962 = vmatpush1.msra.mxu0 %v1961
    %1963 = vmatprep.subr.mxu0 0.0
    %v1964 = vand.u32 %v93, 4294901760
    %1965 = vmatpush1.msra.mxu0 %v1964
    %1966 = vmatprep.subr.mxu0 0.0
    %v1967 = vand.u32 %v92, 4294901760
    %1968 = vmatpush1.msra.mxu0 %v1967
    %1969 = vmatprep.subr.mxu0 0.0
    %v1970 = vand.u32 %v91, 4294901760
    %1971 = vmatpush1.msra.mxu0 %v1970
    %1972 = vmatprep.subr.mxu0 0.0
    %v1973 = vand.u32 %v90, 4294901760
    %1974 = vmatpush1.msra.mxu0 %v1973
    %1975 = vmatprep.subr.mxu0 0.0
    %v1976 = vand.u32 %v89, 4294901760
    %1977 = vmatpush1.msra.mxu0 %v1976
    %1978 = vmatprep.subr.mxu0 0.0
    %v1979 = vand.u32 %v88, 4294901760
    %1980 = vmatpush1.msra.mxu0 %v1979
    %1981 = vmatprep.subr.mxu0 0.0
    %v1982 = vand.u32 %v87, 4294901760
    %1983 = vmatpush1.msra.mxu0 %v1982
    %1984 = vmatprep.subr.mxu0 0.0
    %v1985 = vand.u32 %v86, 4294901760
    %1986 = vmatpush1.msra.mxu0 %v1985
    %1987 = vmatprep.subr.mxu0 0.0
    %v1988 = vand.u32 %v117, 4294901760
    %1989 = vmatpush2.msra.mxu0 %v1988
    %1990 = vmatprep.subr.mxu0 0.0
    %v1991 = vand.u32 %v116, 4294901760
    %1992 = vmatpush2.msra.mxu0 %v1991
    %1993 = vmatprep.subr.mxu0 0.0
    %v1994 = vand.u32 %v115, 4294901760
    %1995 = vmatpush2.msra.mxu0 %v1994
    %1996 = vmatprep.subr.mxu0 0.0
    %v1997 = vand.u32 %v114, 4294901760
    %1998 = vmatpush2.msra.mxu0 %v1997
    %1999 = vmatprep.subr.mxu0 0.0
    %v2000 = vand.u32 %v113, 4294901760
    %2001 = vmatpush2.msra.mxu0 %v2000
    %2002 = vmatprep.subr.mxu0 0.0
    %v2003 = vand.u32 %v112, 4294901760
    %2004 = vmatpush2.msra.mxu0 %v2003
    %2005 = vmatprep.subr.mxu0 0.0
    %v2006 = vand.u32 %v111, 4294901760
    %2007 = vmatpush2.msra.mxu0 %v2006
    %2008 = vmatprep.subr.mxu0 0.0
    %v2009 = vand.u32 %v110, 4294901760
    %2010 = vmatpush2.msra.mxu0 %v2009
    %2011 = vmatprep.subr.mxu0 0.0
    %v2012 = vand.u32 %v109, 4294901760
    %2013 = vmatpush2.msra.mxu0 %v2012
    %2014 = vmatprep.subr.mxu0 0.0
    %v2015 = vand.u32 %v108, 4294901760
    %2016 = vmatpush2.msra.mxu0 %v2015
    %2017 = vmatprep.subr.mxu0 0.0
    %v2018 = vand.u32 %v107, 4294901760
    %2019 = vmatpush2.msra.mxu0 %v2018
    %2020 = vmatprep.subr.mxu0 0.0
    %v2021 = vand.u32 %v106, 4294901760
    %2022 = vmatpush2.msra.mxu0 %v2021
    %2023 = vmatprep.subr.mxu0 0.0
    %v2024 = vand.u32 %v105, 4294901760
    %2025 = vmatpush2.msra.mxu0 %v2024
    %2026 = vmatprep.subr.mxu0 0.0
    %v2027 = vand.u32 %v104, 4294901760
    %2028 = vmatpush2.msra.mxu0 %v2027
    %2029 = vmatprep.subr.mxu0 0.0
    %v2030 = vand.u32 %v103, 4294901760
    %2031 = vmatpush2.msra.mxu0 %v2030
    %2032 = vmatprep.subr.mxu0 0.0
    %v2033 = vand.u32 %v102, 4294901760
    %2034 = vmatpush2.msra.mxu0 %v2033
    %v2035 = vand.u32 %v204, 4294901760
    %v2036 = vsub.f32 %v204, %v2035
    %v2037 = vand.u32 %v2036, 4294901760
    %v2038 = vsub.f32 %v2036, %v2037
    %v2039 = vand.u32 %v2038, 4294901760
    %2040 = vmatprep.mubr.f32.mxu0 %v2039
    %v2041 = vand.u32 %v203, 4294901760
    %v2042 = vsub.f32 %v203, %v2041
    %v2043 = vand.u32 %v2042, 4294901760
    %v2044 = vsub.f32 %v2042, %v2043
    %v2045 = vand.u32 %v2044, 4294901760
    %2046 = vmatmul.mubr.f32.gmra.mxu0 %v2045
    %v2047 = vpop.f32.mrf.mxu0
    %v2048 = vadd.f32 %v1936, %v2047
    %v2049 = vpop.f32.mrf.mxu0
    %2050 = vdwg.mxu0
    %2051 = vmatprep.subr.mxu0 0.0
    %v2052 = vand.u32 %v101, 4294901760
    %v2053 = vsub.f32 %v101, %v2052
    %v2054 = vand.u32 %v2053, 4294901760
    %v2055 = vsub.f32 %v2053, %v2054
    %v2056 = vand.u32 %v2055, 4294901760
    %2057 = vmatpush1.msra.mxu0 %v2056
    %2058 = vmatprep.subr.mxu0 0.0
    %v2059 = vand.u32 %v100, 4294901760
    %v2060 = vsub.f32 %v100, %v2059
    %v2061 = vand.u32 %v2060, 4294901760
    %v2062 = vsub.f32 %v2060, %v2061
    %v2063 = vand.u32 %v2062, 4294901760
    %2064 = vmatpush1.msra.mxu0 %v2063
    %2065 = vmatprep.subr.mxu0 0.0
    %v2066 = vand.u32 %v99, 4294901760
    %v2067 = vsub.f32 %v99, %v2066
    %v2068 = vand.u32 %v2067, 4294901760
    %v2069 = vsub.f32 %v2067, %v2068
    %v2070 = vand.u32 %v2069, 4294901760
    %2071 = vmatpush1.msra.mxu0 %v2070
    %2072 = vmatprep.subr.mxu0 0.0
    %v2073 = vand.u32 %v98, 4294901760
    %v2074 = vsub.f32 %v98, %v2073
    %v2075 = vand.u32 %v2074, 4294901760
    %v2076 = vsub.f32 %v2074, %v2075
    %v2077 = vand.u32 %v2076, 4294901760
    %2078 = vmatpush1.msra.mxu0 %v2077
    %2079 = vmatprep.subr.mxu0 0.0
    %v2080 = vand.u32 %v97, 4294901760
    %v2081 = vsub.f32 %v97, %v2080
    %v2082 = vand.u32 %v2081, 4294901760
    %v2083 = vsub.f32 %v2081, %v2082
    %v2084 = vand.u32 %v2083, 4294901760
    %2085 = vmatpush1.msra.mxu0 %v2084
    %2086 = vmatprep.subr.mxu0 0.0
    %v2087 = vand.u32 %v96, 4294901760
    %v2088 = vsub.f32 %v96, %v2087
    %v2089 = vand.u32 %v2088, 4294901760
    %v2090 = vsub.f32 %v2088, %v2089
    %v2091 = vand.u32 %v2090, 4294901760
    %2092 = vmatpush1.msra.mxu0 %v2091
    %2093 = vmatprep.subr.mxu0 0.0
    %v2094 = vand.u32 %v95, 4294901760
    %v2095 = vsub.f32 %v95, %v2094
    %v2096 = vand.u32 %v2095, 4294901760
    %v2097 = vsub.f32 %v2095, %v2096
    %v2098 = vand.u32 %v2097, 4294901760
    %2099 = vmatpush1.msra.mxu0 %v2098
    %2100 = vmatprep.subr.mxu0 0.0
    %v2101 = vand.u32 %v94, 4294901760
    %v2102 = vsub.f32 %v94, %v2101
    %v2103 = vand.u32 %v2102, 4294901760
    %v2104 = vsub.f32 %v2102, %v2103
    %v2105 = vand.u32 %v2104, 4294901760
    %2106 = vmatpush1.msra.mxu0 %v2105
    %2107 = vmatprep.subr.mxu0 0.0
    %v2108 = vand.u32 %v93, 4294901760
    %v2109 = vsub.f32 %v93, %v2108
    %v2110 = vand.u32 %v2109, 4294901760
    %v2111 = vsub.f32 %v2109, %v2110
    %v2112 = vand.u32 %v2111, 4294901760
    %2113 = vmatpush1.msra.mxu0 %v2112
    %2114 = vmatprep.subr.mxu0 0.0
    %v2115 = vand.u32 %v92, 4294901760
    %v2116 = vsub.f32 %v92, %v2115
    %v2117 = vand.u32 %v2116, 4294901760
    %v2118 = vsub.f32 %v2116, %v2117
    %v2119 = vand.u32 %v2118, 4294901760
    %2120 = vmatpush1.msra.mxu0 %v2119
    %2121 = vmatprep.subr.mxu0 0.0
    %v2122 = vand.u32 %v91, 4294901760
    %v2123 = vsub.f32 %v91, %v2122
    %v2124 = vand.u32 %v2123, 4294901760
    %v2125 = vsub.f32 %v2123, %v2124
    %v2126 = vand.u32 %v2125, 4294901760
    %2127 = vmatpush1.msra.mxu0 %v2126
    %2128 = vmatprep.subr.mxu0 0.0
    %v2129 = vand.u32 %v90, 4294901760
    %v2130 = vsub.f32 %v90, %v2129
    %v2131 = vand.u32 %v2130, 4294901760
    %v2132 = vsub.f32 %v2130, %v2131
    %v2133 = vand.u32 %v2132, 4294901760
    %2134 = vmatpush1.msra.mxu0 %v2133
    %2135 = vmatprep.subr.mxu0 0.0
    %v2136 = vand.u32 %v89, 4294901760
    %v2137 = vsub.f32 %v89, %v2136
    %v2138 = vand.u32 %v2137, 4294901760
    %v2139 = vsub.f32 %v2137, %v2138
    %v2140 = vand.u32 %v2139, 4294901760
    %2141 = vmatpush1.msra.mxu0 %v2140
    %2142 = vmatprep.subr.mxu0 0.0
    %v2143 = vand.u32 %v88, 4294901760
    %v2144 = vsub.f32 %v88, %v2143
    %v2145 = vand.u32 %v2144, 4294901760
    %v2146 = vsub.f32 %v2144, %v2145
    %v2147 = vand.u32 %v2146, 4294901760
    %2148 = vmatpush1.msra.mxu0 %v2147
    %2149 = vmatprep.subr.mxu0 0.0
    %v2150 = vand.u32 %v87, 4294901760
    %v2151 = vsub.f32 %v87, %v2150
    %v2152 = vand.u32 %v2151, 4294901760
    %v2153 = vsub.f32 %v2151, %v2152
    %v2154 = vand.u32 %v2153, 4294901760
    %2155 = vmatpush1.msra.mxu0 %v2154
    %2156 = vmatprep.subr.mxu0 0.0
    %v2157 = vand.u32 %v86, 4294901760
    %v2158 = vsub.f32 %v86, %v2157
    %v2159 = vand.u32 %v2158, 4294901760
    %v2160 = vsub.f32 %v2158, %v2159
    %v2161 = vand.u32 %v2160, 4294901760
    %2162 = vmatpush1.msra.mxu0 %v2161
    %2163 = vmatprep.subr.mxu0 0.0
    %v2164 = vand.u32 %v117, 4294901760
    %v2165 = vsub.f32 %v117, %v2164
    %v2166 = vand.u32 %v2165, 4294901760
    %v2167 = vsub.f32 %v2165, %v2166
    %v2168 = vand.u32 %v2167, 4294901760
    %2169 = vmatpush2.msra.mxu0 %v2168
    %2170 = vmatprep.subr.mxu0 0.0
    %v2171 = vand.u32 %v116, 4294901760
    %v2172 = vsub.f32 %v116, %v2171
    %v2173 = vand.u32 %v2172, 4294901760
    %v2174 = vsub.f32 %v2172, %v2173
    %v2175 = vand.u32 %v2174, 4294901760
    %2176 = vmatpush2.msra.mxu0 %v2175
    %2177 = vmatprep.subr.mxu0 0.0
    %v2178 = vand.u32 %v115, 4294901760
    %v2179 = vsub.f32 %v115, %v2178
    %v2180 = vand.u32 %v2179, 4294901760
    %v2181 = vsub.f32 %v2179, %v2180
    %v2182 = vand.u32 %v2181, 4294901760
    %2183 = vmatpush2.msra.mxu0 %v2182
    %2184 = vmatprep.subr.mxu0 0.0
    %v2185 = vand.u32 %v114, 4294901760
    %v2186 = vsub.f32 %v114, %v2185
    %v2187 = vand.u32 %v2186, 4294901760
    %v2188 = vsub.f32 %v2186, %v2187
    %v2189 = vand.u32 %v2188, 4294901760
    %2190 = vmatpush2.msra.mxu0 %v2189
    %2191 = vmatprep.subr.mxu0 0.0
    %v2192 = vand.u32 %v113, 4294901760
    %v2193 = vsub.f32 %v113, %v2192
    %v2194 = vand.u32 %v2193, 4294901760
    %v2195 = vsub.f32 %v2193, %v2194
    %v2196 = vand.u32 %v2195, 4294901760
    %2197 = vmatpush2.msra.mxu0 %v2196
    %2198 = vmatprep.subr.mxu0 0.0
    %v2199 = vand.u32 %v112, 4294901760
    %v2200 = vsub.f32 %v112, %v2199
    %v2201 = vand.u32 %v2200, 4294901760
    %v2202 = vsub.f32 %v2200, %v2201
    %v2203 = vand.u32 %v2202, 4294901760
    %2204 = vmatpush2.msra.mxu0 %v2203
    %2205 = vmatprep.subr.mxu0 0.0
    %v2206 = vand.u32 %v111, 4294901760
    %v2207 = vsub.f32 %v111, %v2206
    %v2208 = vand.u32 %v2207, 4294901760
    %v2209 = vsub.f32 %v2207, %v2208
    %v2210 = vand.u32 %v2209, 4294901760
    %2211 = vmatpush2.msra.mxu0 %v2210
    %2212 = vmatprep.subr.mxu0 0.0
    %v2213 = vand.u32 %v110, 4294901760
    %v2214 = vsub.f32 %v110, %v2213
    %v2215 = vand.u32 %v2214, 4294901760
    %v2216 = vsub.f32 %v2214, %v2215
    %v2217 = vand.u32 %v2216, 4294901760
    %2218 = vmatpush2.msra.mxu0 %v2217
    %2219 = vmatprep.subr.mxu0 0.0
    %v2220 = vand.u32 %v109, 4294901760
    %v2221 = vsub.f32 %v109, %v2220
    %v2222 = vand.u32 %v2221, 4294901760
    %v2223 = vsub.f32 %v2221, %v2222
    %v2224 = vand.u32 %v2223, 4294901760
    %2225 = vmatpush2.msra.mxu0 %v2224
    %2226 = vmatprep.subr.mxu0 0.0
    %v2227 = vand.u32 %v108, 4294901760
    %v2228 = vsub.f32 %v108, %v2227
    %v2229 = vand.u32 %v2228, 4294901760
    %v2230 = vsub.f32 %v2228, %v2229
    %v2231 = vand.u32 %v2230, 4294901760
    %2232 = vmatpush2.msra.mxu0 %v2231
    %2233 = vmatprep.subr.mxu0 0.0
    %v2234 = vand.u32 %v107, 4294901760
    %v2235 = vsub.f32 %v107, %v2234
    %v2236 = vand.u32 %v2235, 4294901760
    %v2237 = vsub.f32 %v2235, %v2236
    %v2238 = vand.u32 %v2237, 4294901760
    %2239 = vmatpush2.msra.mxu0 %v2238
    %2240 = vmatprep.subr.mxu0 0.0
    %v2241 = vand.u32 %v106, 4294901760
    %v2242 = vsub.f32 %v106, %v2241
    %v2243 = vand.u32 %v2242, 4294901760
    %v2244 = vsub.f32 %v2242, %v2243
    %v2245 = vand.u32 %v2244, 4294901760
    %2246 = vmatpush2.msra.mxu0 %v2245
    %2247 = vmatprep.subr.mxu0 0.0
    %v2248 = vand.u32 %v105, 4294901760
    %v2249 = vsub.f32 %v105, %v2248
    %v2250 = vand.u32 %v2249, 4294901760
    %v2251 = vsub.f32 %v2249, %v2250
    %v2252 = vand.u32 %v2251, 4294901760
    %2253 = vmatpush2.msra.mxu0 %v2252
    %2254 = vmatprep.subr.mxu0 0.0
    %v2255 = vand.u32 %v104, 4294901760
    %v2256 = vsub.f32 %v104, %v2255
    %v2257 = vand.u32 %v2256, 4294901760
    %v2258 = vsub.f32 %v2256, %v2257
    %v2259 = vand.u32 %v2258, 4294901760
    %2260 = vmatpush2.msra.mxu0 %v2259
    %2261 = vmatprep.subr.mxu0 0.0
    %v2262 = vand.u32 %v103, 4294901760
    %v2263 = vsub.f32 %v103, %v2262
    %v2264 = vand.u32 %v2263, 4294901760
    %v2265 = vsub.f32 %v2263, %v2264
    %v2266 = vand.u32 %v2265, 4294901760
    %2267 = vmatpush2.msra.mxu0 %v2266
    %2268 = vmatprep.subr.mxu0 0.0
    %v2269 = vand.u32 %v102, 4294901760
    %v2270 = vsub.f32 %v102, %v2269
    %v2271 = vand.u32 %v2270, 4294901760
    %v2272 = vsub.f32 %v2270, %v2271
    %v2273 = vand.u32 %v2272, 4294901760
    %2274 = vmatpush2.msra.mxu0 %v2273
    %v2275 = vand.u32 %v204, 4294901760
    %2276 = vmatprep.mubr.f32.mxu0 %v2275
    %v2277 = vand.u32 %v203, 4294901760
    %2278 = vmatmul.mubr.f32.gmra.mxu0 %v2277
    %v2279 = vpop.f32.mrf.mxu0
    %v2280 = vadd.f32 %v2048, %v2279
    %v2281 = vpop.f32.mrf.mxu0
    %2282 = vdwg.mxu0
    %2283 = vmatprep.subr.mxu0 0.0
    %v2284 = vand.u32 %v101, 4294901760
    %v2285 = vsub.f32 %v101, %v2284
    %2286 = vmatpush1.msra.mxu0 %v2285
    %2287 = vmatprep.subr.mxu0 0.0
    %v2288 = vand.u32 %v100, 4294901760
    %v2289 = vsub.f32 %v100, %v2288
    %2290 = vmatpush1.msra.mxu0 %v2289
    %2291 = vmatprep.subr.mxu0 0.0
    %v2292 = vand.u32 %v99, 4294901760
    %v2293 = vsub.f32 %v99, %v2292
    %2294 = vmatpush1.msra.mxu0 %v2293
    %2295 = vmatprep.subr.mxu0 0.0
    %v2296 = vand.u32 %v98, 4294901760
    %v2297 = vsub.f32 %v98, %v2296
    %2298 = vmatpush1.msra.mxu0 %v2297
    %2299 = vmatprep.subr.mxu0 0.0
    %v2300 = vand.u32 %v97, 4294901760
    %v2301 = vsub.f32 %v97, %v2300
    %2302 = vmatpush1.msra.mxu0 %v2301
    %2303 = vmatprep.subr.mxu0 0.0
    %v2304 = vand.u32 %v96, 4294901760
    %v2305 = vsub.f32 %v96, %v2304
    %2306 = vmatpush1.msra.mxu0 %v2305
    %2307 = vmatprep.subr.mxu0 0.0
    %v2308 = vand.u32 %v95, 4294901760
    %v2309 = vsub.f32 %v95, %v2308
    %2310 = vmatpush1.msra.mxu0 %v2309
    %2311 = vmatprep.subr.mxu0 0.0
    %v2312 = vand.u32 %v94, 4294901760
    %v2313 = vsub.f32 %v94, %v2312
    %2314 = vmatpush1.msra.mxu0 %v2313
    %2315 = vmatprep.subr.mxu0 0.0
    %v2316 = vand.u32 %v93, 4294901760
    %v2317 = vsub.f32 %v93, %v2316
    %2318 = vmatpush1.msra.mxu0 %v2317
    %2319 = vmatprep.subr.mxu0 0.0
    %v2320 = vand.u32 %v92, 4294901760
    %v2321 = vsub.f32 %v92, %v2320
    %2322 = vmatpush1.msra.mxu0 %v2321
    %2323 = vmatprep.subr.mxu0 0.0
    %v2324 = vand.u32 %v91, 4294901760
    %v2325 = vsub.f32 %v91, %v2324
    %2326 = vmatpush1.msra.mxu0 %v2325
    %2327 = vmatprep.subr.mxu0 0.0
    %v2328 = vand.u32 %v90, 4294901760
    %v2329 = vsub.f32 %v90, %v2328
    %2330 = vmatpush1.msra.mxu0 %v2329
    %2331 = vmatprep.subr.mxu0 0.0
    %v2332 = vand.u32 %v89, 4294901760
    %v2333 = vsub.f32 %v89, %v2332
    %2334 = vmatpush1.msra.mxu0 %v2333
    %2335 = vmatprep.subr.mxu0 0.0
    %v2336 = vand.u32 %v88, 4294901760
    %v2337 = vsub.f32 %v88, %v2336
    %2338 = vmatpush1.msra.mxu0 %v2337
    %2339 = vmatprep.subr.mxu0 0.0
    %v2340 = vand.u32 %v87, 4294901760
    %v2341 = vsub.f32 %v87, %v2340
    %2342 = vmatpush1.msra.mxu0 %v2341
    %2343 = vmatprep.subr.mxu0 0.0
    %v2344 = vand.u32 %v86, 4294901760
    %v2345 = vsub.f32 %v86, %v2344
    %2346 = vmatpush1.msra.mxu0 %v2345
    %2347 = vmatprep.subr.mxu0 0.0
    %v2348 = vand.u32 %v117, 4294901760
    %v2349 = vsub.f32 %v117, %v2348
    %2350 = vmatpush2.msra.mxu0 %v2349
    %2351 = vmatprep.subr.mxu0 0.0
    %v2352 = vand.u32 %v116, 4294901760
    %v2353 = vsub.f32 %v116, %v2352
    %2354 = vmatpush2.msra.mxu0 %v2353
    %2355 = vmatprep.subr.mxu0 0.0
    %v2356 = vand.u32 %v115, 4294901760
    %v2357 = vsub.f32 %v115, %v2356
    %2358 = vmatpush2.msra.mxu0 %v2357
    %2359 = vmatprep.subr.mxu0 0.0
    %v2360 = vand.u32 %v114, 4294901760
    %v2361 = vsub.f32 %v114, %v2360
    %2362 = vmatpush2.msra.mxu0 %v2361
    %2363 = vmatprep.subr.mxu0 0.0
    %v2364 = vand.u32 %v113, 4294901760
    %v2365 = vsub.f32 %v113, %v2364
    %2366 = vmatpush2.msra.mxu0 %v2365
    %2367 = vmatprep.subr.mxu0 0.0
    %v2368 = vand.u32 %v112, 4294901760
    %v2369 = vsub.f32 %v112, %v2368
    %2370 = vmatpush2.msra.mxu0 %v2369
    %2371 = vmatprep.subr.mxu0 0.0
    %v2372 = vand.u32 %v111, 4294901760
    %v2373 = vsub.f32 %v111, %v2372
    %2374 = vmatpush2.msra.mxu0 %v2373
    %2375 = vmatprep.subr.mxu0 0.0
    %v2376 = vand.u32 %v110, 4294901760
    %v2377 = vsub.f32 %v110, %v2376
    %2378 = vmatpush2.msra.mxu0 %v2377
    %2379 = vmatprep.subr.mxu0 0.0
    %v2380 = vand.u32 %v109, 4294901760
    %v2381 = vsub.f32 %v109, %v2380
    %2382 = vmatpush2.msra.mxu0 %v2381
    %2383 = vmatprep.subr.mxu0 0.0
    %v2384 = vand.u32 %v108, 4294901760
    %v2385 = vsub.f32 %v108, %v2384
    %2386 = vmatpush2.msra.mxu0 %v2385
    %2387 = vmatprep.subr.mxu0 0.0
    %v2388 = vand.u32 %v107, 4294901760
    %v2389 = vsub.f32 %v107, %v2388
    %2390 = vmatpush2.msra.mxu0 %v2389
    %2391 = vmatprep.subr.mxu0 0.0
    %v2392 = vand.u32 %v106, 4294901760
    %v2393 = vsub.f32 %v106, %v2392
    %2394 = vmatpush2.msra.mxu0 %v2393
    %2395 = vmatprep.subr.mxu0 0.0
    %v2396 = vand.u32 %v105, 4294901760
    %v2397 = vsub.f32 %v105, %v2396
    %2398 = vmatpush2.msra.mxu0 %v2397
    %2399 = vmatprep.subr.mxu0 0.0
    %v2400 = vand.u32 %v104, 4294901760
    %v2401 = vsub.f32 %v104, %v2400
    %2402 = vmatpush2.msra.mxu0 %v2401
    %2403 = vmatprep.subr.mxu0 0.0
    %v2404 = vand.u32 %v103, 4294901760
    %v2405 = vsub.f32 %v103, %v2404
    %2406 = vmatpush2.msra.mxu0 %v2405
    %2407 = vmatprep.subr.mxu0 0.0
    %v2408 = vand.u32 %v102, 4294901760
    %v2409 = vsub.f32 %v102, %v2408
    %2410 = vmatpush2.msra.mxu0 %v2409
    %v2411 = vand.u32 %v204, 4294901760
    %v2412 = vsub.f32 %v204, %v2411
    %2413 = vmatprep.mubr.f32.mxu0 %v2412
    %v2414 = vand.u32 %v203, 4294901760
    %v2415 = vsub.f32 %v203, %v2414
    %2416 = vmatmul.mubr.f32.gmra.mxu0 %v2415
    %v2417 = vpop.f32.mrf.mxu0
    %v2418 = vadd.f32 %v2280, %v2417
    %v2419 = vpop.f32.mrf.mxu0
    %2420 = vdwg.mxu0
    %2421 = vmatprep.subr.mxu0 0.0
    %v2422 = vand.u32 %v101, 4294901760
    %2423 = vmatpush1.msra.mxu0 %v2422
    %2424 = vmatprep.subr.mxu0 0.0
    %v2425 = vand.u32 %v100, 4294901760
    %2426 = vmatpush1.msra.mxu0 %v2425
    %2427 = vmatprep.subr.mxu0 0.0
    %v2428 = vand.u32 %v99, 4294901760
    %2429 = vmatpush1.msra.mxu0 %v2428
    %2430 = vmatprep.subr.mxu0 0.0
    %v2431 = vand.u32 %v98, 4294901760
    %2432 = vmatpush1.msra.mxu0 %v2431
    %2433 = vmatprep.subr.mxu0 0.0
    %v2434 = vand.u32 %v97, 4294901760
    %2435 = vmatpush1.msra.mxu0 %v2434
    %2436 = vmatprep.subr.mxu0 0.0
    %v2437 = vand.u32 %v96, 4294901760
    %2438 = vmatpush1.msra.mxu0 %v2437
    %2439 = vmatprep.subr.mxu0 0.0
    %v2440 = vand.u32 %v95, 4294901760
    %2441 = vmatpush1.msra.mxu0 %v2440
    %2442 = vmatprep.subr.mxu0 0.0
    %v2443 = vand.u32 %v94, 4294901760
    %2444 = vmatpush1.msra.mxu0 %v2443
    %2445 = vmatprep.subr.mxu0 0.0
    %v2446 = vand.u32 %v93, 4294901760
    %2447 = vmatpush1.msra.mxu0 %v2446
    %2448 = vmatprep.subr.mxu0 0.0
    %v2449 = vand.u32 %v92, 4294901760
    %2450 = vmatpush1.msra.mxu0 %v2449
    %2451 = vmatprep.subr.mxu0 0.0
    %v2452 = vand.u32 %v91, 4294901760
    %2453 = vmatpush1.msra.mxu0 %v2452
    %2454 = vmatprep.subr.mxu0 0.0
    %v2455 = vand.u32 %v90, 4294901760
    %2456 = vmatpush1.msra.mxu0 %v2455
    %2457 = vmatprep.subr.mxu0 0.0
    %v2458 = vand.u32 %v89, 4294901760
    %2459 = vmatpush1.msra.mxu0 %v2458
    %2460 = vmatprep.subr.mxu0 0.0
    %v2461 = vand.u32 %v88, 4294901760
    %2462 = vmatpush1.msra.mxu0 %v2461
    %2463 = vmatprep.subr.mxu0 0.0
    %v2464 = vand.u32 %v87, 4294901760
    %2465 = vmatpush1.msra.mxu0 %v2464
    %2466 = vmatprep.subr.mxu0 0.0
    %v2467 = vand.u32 %v86, 4294901760
    %2468 = vmatpush1.msra.mxu0 %v2467
    %2469 = vmatprep.subr.mxu0 0.0
    %v2470 = vand.u32 %v117, 4294901760
    %2471 = vmatpush2.msra.mxu0 %v2470
    %2472 = vmatprep.subr.mxu0 0.0
    %v2473 = vand.u32 %v116, 4294901760
    %2474 = vmatpush2.msra.mxu0 %v2473
    %2475 = vmatprep.subr.mxu0 0.0
    %v2476 = vand.u32 %v115, 4294901760
    %2477 = vmatpush2.msra.mxu0 %v2476
    %2478 = vmatprep.subr.mxu0 0.0
    %v2479 = vand.u32 %v114, 4294901760
    %2480 = vmatpush2.msra.mxu0 %v2479
    %2481 = vmatprep.subr.mxu0 0.0
    %v2482 = vand.u32 %v113, 4294901760
    %2483 = vmatpush2.msra.mxu0 %v2482
    %2484 = vmatprep.subr.mxu0 0.0
    %v2485 = vand.u32 %v112, 4294901760
    %2486 = vmatpush2.msra.mxu0 %v2485
    %2487 = vmatprep.subr.mxu0 0.0
    %v2488 = vand.u32 %v111, 4294901760
    %2489 = vmatpush2.msra.mxu0 %v2488
    %2490 = vmatprep.subr.mxu0 0.0
    %v2491 = vand.u32 %v110, 4294901760
    %2492 = vmatpush2.msra.mxu0 %v2491
    %2493 = vmatprep.subr.mxu0 0.0
    %v2494 = vand.u32 %v109, 4294901760
    %2495 = vmatpush2.msra.mxu0 %v2494
    %2496 = vmatprep.subr.mxu0 0.0
    %v2497 = vand.u32 %v108, 4294901760
    %2498 = vmatpush2.msra.mxu0 %v2497
    %2499 = vmatprep.subr.mxu0 0.0
    %v2500 = vand.u32 %v107, 4294901760
    %2501 = vmatpush2.msra.mxu0 %v2500
    %2502 = vmatprep.subr.mxu0 0.0
    %v2503 = vand.u32 %v106, 4294901760
    %2504 = vmatpush2.msra.mxu0 %v2503
    %2505 = vmatprep.subr.mxu0 0.0
    %v2506 = vand.u32 %v105, 4294901760
    %2507 = vmatpush2.msra.mxu0 %v2506
    %2508 = vmatprep.subr.mxu0 0.0
    %v2509 = vand.u32 %v104, 4294901760
    %2510 = vmatpush2.msra.mxu0 %v2509
    %2511 = vmatprep.subr.mxu0 0.0
    %v2512 = vand.u32 %v103, 4294901760
    %2513 = vmatpush2.msra.mxu0 %v2512
    %2514 = vmatprep.subr.mxu0 0.0
    %v2515 = vand.u32 %v102, 4294901760
    %2516 = vmatpush2.msra.mxu0 %v2515
    %v2517 = vand.u32 %v204, 4294901760
    %v2518 = vsub.f32 %v204, %v2517
    %v2519 = vand.u32 %v2518, 4294901760
    %2520 = vmatprep.mubr.f32.mxu0 %v2519
    %v2521 = vand.u32 %v203, 4294901760
    %v2522 = vsub.f32 %v203, %v2521
    %v2523 = vand.u32 %v2522, 4294901760
    %2524 = vmatmul.mubr.f32.gmra.mxu0 %v2523
    %v2525 = vpop.f32.mrf.mxu0
    %v2526 = vadd.f32 %v2418, %v2525
    %v2527 = vpop.f32.mrf.mxu0
    %2528 = vdwg.mxu0
    %2529 = vmatprep.subr.mxu0 0.0
    %v2530 = vand.u32 %v101, 4294901760
    %v2531 = vsub.f32 %v101, %v2530
    %v2532 = vand.u32 %v2531, 4294901760
    %2533 = vmatpush1.msra.mxu0 %v2532
    %2534 = vmatprep.subr.mxu0 0.0
    %v2535 = vand.u32 %v100, 4294901760
    %v2536 = vsub.f32 %v100, %v2535
    %v2537 = vand.u32 %v2536, 4294901760
    %2538 = vmatpush1.msra.mxu0 %v2537
    %2539 = vmatprep.subr.mxu0 0.0
    %v2540 = vand.u32 %v99, 4294901760
    %v2541 = vsub.f32 %v99, %v2540
    %v2542 = vand.u32 %v2541, 4294901760
    %2543 = vmatpush1.msra.mxu0 %v2542
    %2544 = vmatprep.subr.mxu0 0.0
    %v2545 = vand.u32 %v98, 4294901760
    %v2546 = vsub.f32 %v98, %v2545
    %v2547 = vand.u32 %v2546, 4294901760
    %2548 = vmatpush1.msra.mxu0 %v2547
    %2549 = vmatprep.subr.mxu0 0.0
    %v2550 = vand.u32 %v97, 4294901760
    %v2551 = vsub.f32 %v97, %v2550
    %v2552 = vand.u32 %v2551, 4294901760
    %2553 = vmatpush1.msra.mxu0 %v2552
    %2554 = vmatprep.subr.mxu0 0.0
    %v2555 = vand.u32 %v96, 4294901760
    %v2556 = vsub.f32 %v96, %v2555
    %v2557 = vand.u32 %v2556, 4294901760
    %2558 = vmatpush1.msra.mxu0 %v2557
    %2559 = vmatprep.subr.mxu0 0.0
    %v2560 = vand.u32 %v95, 4294901760
    %v2561 = vsub.f32 %v95, %v2560
    %v2562 = vand.u32 %v2561, 4294901760
    %2563 = vmatpush1.msra.mxu0 %v2562
    %2564 = vmatprep.subr.mxu0 0.0
    %v2565 = vand.u32 %v94, 4294901760
    %v2566 = vsub.f32 %v94, %v2565
    %v2567 = vand.u32 %v2566, 4294901760
    %2568 = vmatpush1.msra.mxu0 %v2567
    %2569 = vmatprep.subr.mxu0 0.0
    %v2570 = vand.u32 %v93, 4294901760
    %v2571 = vsub.f32 %v93, %v2570
    %v2572 = vand.u32 %v2571, 4294901760
    %2573 = vmatpush1.msra.mxu0 %v2572
    %2574 = vmatprep.subr.mxu0 0.0
    %v2575 = vand.u32 %v92, 4294901760
    %v2576 = vsub.f32 %v92, %v2575
    %v2577 = vand.u32 %v2576, 4294901760
    %2578 = vmatpush1.msra.mxu0 %v2577
    %2579 = vmatprep.subr.mxu0 0.0
    %v2580 = vand.u32 %v91, 4294901760
    %v2581 = vsub.f32 %v91, %v2580
    %v2582 = vand.u32 %v2581, 4294901760
    %2583 = vmatpush1.msra.mxu0 %v2582
    %2584 = vmatprep.subr.mxu0 0.0
    %v2585 = vand.u32 %v90, 4294901760
    %v2586 = vsub.f32 %v90, %v2585
    %v2587 = vand.u32 %v2586, 4294901760
    %2588 = vmatpush1.msra.mxu0 %v2587
    %2589 = vmatprep.subr.mxu0 0.0
    %v2590 = vand.u32 %v89, 4294901760
    %v2591 = vsub.f32 %v89, %v2590
    %v2592 = vand.u32 %v2591, 4294901760
    %2593 = vmatpush1.msra.mxu0 %v2592
    %2594 = vmatprep.subr.mxu0 0.0
    %v2595 = vand.u32 %v88, 4294901760
    %v2596 = vsub.f32 %v88, %v2595
    %v2597 = vand.u32 %v2596, 4294901760
    %2598 = vmatpush1.msra.mxu0 %v2597
    %2599 = vmatprep.subr.mxu0 0.0
    %v2600 = vand.u32 %v87, 4294901760
    %v2601 = vsub.f32 %v87, %v2600
    %v2602 = vand.u32 %v2601, 4294901760
    %2603 = vmatpush1.msra.mxu0 %v2602
    %2604 = vmatprep.subr.mxu0 0.0
    %v2605 = vand.u32 %v86, 4294901760
    %v2606 = vsub.f32 %v86, %v2605
    %v2607 = vand.u32 %v2606, 4294901760
    %2608 = vmatpush1.msra.mxu0 %v2607
    %2609 = vmatprep.subr.mxu0 0.0
    %v2610 = vand.u32 %v117, 4294901760
    %v2611 = vsub.f32 %v117, %v2610
    %v2612 = vand.u32 %v2611, 4294901760
    %2613 = vmatpush2.msra.mxu0 %v2612
    %2614 = vmatprep.subr.mxu0 0.0
    %v2615 = vand.u32 %v116, 4294901760
    %v2616 = vsub.f32 %v116, %v2615
    %v2617 = vand.u32 %v2616, 4294901760
    %2618 = vmatpush2.msra.mxu0 %v2617
    %2619 = vmatprep.subr.mxu0 0.0
    %v2620 = vand.u32 %v115, 4294901760
    %v2621 = vsub.f32 %v115, %v2620
    %v2622 = vand.u32 %v2621, 4294901760
    %2623 = vmatpush2.msra.mxu0 %v2622
    %2624 = vmatprep.subr.mxu0 0.0
    %v2625 = vand.u32 %v114, 4294901760
    %v2626 = vsub.f32 %v114, %v2625
    %v2627 = vand.u32 %v2626, 4294901760
    %2628 = vmatpush2.msra.mxu0 %v2627
    %2629 = vmatprep.subr.mxu0 0.0
    %v2630 = vand.u32 %v113, 4294901760
    %v2631 = vsub.f32 %v113, %v2630
    %v2632 = vand.u32 %v2631, 4294901760
    %2633 = vmatpush2.msra.mxu0 %v2632
    %2634 = vmatprep.subr.mxu0 0.0
    %v2635 = vand.u32 %v112, 4294901760
    %v2636 = vsub.f32 %v112, %v2635
    %v2637 = vand.u32 %v2636, 4294901760
    %2638 = vmatpush2.msra.mxu0 %v2637
    %2639 = vmatprep.subr.mxu0 0.0
    %v2640 = vand.u32 %v111, 4294901760
    %v2641 = vsub.f32 %v111, %v2640
    %v2642 = vand.u32 %v2641, 4294901760
    %2643 = vmatpush2.msra.mxu0 %v2642
    %2644 = vmatprep.subr.mxu0 0.0
    %v2645 = vand.u32 %v110, 4294901760
    %v2646 = vsub.f32 %v110, %v2645
    %v2647 = vand.u32 %v2646, 4294901760
    %2648 = vmatpush2.msra.mxu0 %v2647
    %2649 = vmatprep.subr.mxu0 0.0
    %v2650 = vand.u32 %v109, 4294901760
    %v2651 = vsub.f32 %v109, %v2650
    %v2652 = vand.u32 %v2651, 4294901760
    %2653 = vmatpush2.msra.mxu0 %v2652
    %2654 = vmatprep.subr.mxu0 0.0
    %v2655 = vand.u32 %v108, 4294901760
    %v2656 = vsub.f32 %v108, %v2655
    %v2657 = vand.u32 %v2656, 4294901760
    %2658 = vmatpush2.msra.mxu0 %v2657
    %2659 = vmatprep.subr.mxu0 0.0
    %v2660 = vand.u32 %v107, 4294901760
    %v2661 = vsub.f32 %v107, %v2660
    %v2662 = vand.u32 %v2661, 4294901760
    %2663 = vmatpush2.msra.mxu0 %v2662
    %2664 = vmatprep.subr.mxu0 0.0
    %v2665 = vand.u32 %v106, 4294901760
    %v2666 = vsub.f32 %v106, %v2665
    %v2667 = vand.u32 %v2666, 4294901760
    %2668 = vmatpush2.msra.mxu0 %v2667
    %2669 = vmatprep.subr.mxu0 0.0
    %v2670 = vand.u32 %v105, 4294901760
    %v2671 = vsub.f32 %v105, %v2670
    %v2672 = vand.u32 %v2671, 4294901760
    %2673 = vmatpush2.msra.mxu0 %v2672
    %2674 = vmatprep.subr.mxu0 0.0
    %v2675 = vand.u32 %v104, 4294901760
    %v2676 = vsub.f32 %v104, %v2675
    %v2677 = vand.u32 %v2676, 4294901760
    %2678 = vmatpush2.msra.mxu0 %v2677
    %2679 = vmatprep.subr.mxu0 0.0
    %v2680 = vand.u32 %v103, 4294901760
    %v2681 = vsub.f32 %v103, %v2680
    %v2682 = vand.u32 %v2681, 4294901760
    %2683 = vmatpush2.msra.mxu0 %v2682
    %2684 = vmatprep.subr.mxu0 0.0
    %v2685 = vand.u32 %v102, 4294901760
    %v2686 = vsub.f32 %v102, %v2685
    %v2687 = vand.u32 %v2686, 4294901760
    %2688 = vmatpush2.msra.mxu0 %v2687
    %v2689 = vand.u32 %v204, 4294901760
    %2690 = vmatprep.mubr.f32.mxu0 %v2689
    %v2691 = vand.u32 %v203, 4294901760
    %2692 = vmatmul.mubr.f32.gmra.mxu0 %v2691
    %v2693 = vpop.f32.mrf.mxu0
    %v2694 = vadd.f32 %v2526, %v2693
    %v2695 = vpop.f32.mrf.mxu0
    %2696 = vdwg.mxu0
    %2697 = vmatprep.subr.mxu0 0.0
    %v2698 = vand.u32 %v101, 4294901760
    %2699 = vmatpush1.msra.mxu0 %v2698
    %2700 = vmatprep.subr.mxu0 0.0
    %v2701 = vand.u32 %v100, 4294901760
    %2702 = vmatpush1.msra.mxu0 %v2701
    %2703 = vmatprep.subr.mxu0 0.0
    %v2704 = vand.u32 %v99, 4294901760
    %2705 = vmatpush1.msra.mxu0 %v2704
    %2706 = vmatprep.subr.mxu0 0.0
    %v2707 = vand.u32 %v98, 4294901760
    %2708 = vmatpush1.msra.mxu0 %v2707
    %2709 = vmatprep.subr.mxu0 0.0
    %v2710 = vand.u32 %v97, 4294901760
    %2711 = vmatpush1.msra.mxu0 %v2710
    %2712 = vmatprep.subr.mxu0 0.0
    %v2713 = vand.u32 %v96, 4294901760
    %2714 = vmatpush1.msra.mxu0 %v2713
    %2715 = vmatprep.subr.mxu0 0.0
    %v2716 = vand.u32 %v95, 4294901760
    %2717 = vmatpush1.msra.mxu0 %v2716
    %2718 = vmatprep.subr.mxu0 0.0
    %v2719 = vand.u32 %v94, 4294901760
    %2720 = vmatpush1.msra.mxu0 %v2719
    %2721 = vmatprep.subr.mxu0 0.0
    %v2722 = vand.u32 %v93, 4294901760
    %2723 = vmatpush1.msra.mxu0 %v2722
    %2724 = vmatprep.subr.mxu0 0.0
    %v2725 = vand.u32 %v92, 4294901760
    %2726 = vmatpush1.msra.mxu0 %v2725
    %2727 = vmatprep.subr.mxu0 0.0
    %v2728 = vand.u32 %v91, 4294901760
    %2729 = vmatpush1.msra.mxu0 %v2728
    %2730 = vmatprep.subr.mxu0 0.0
    %v2731 = vand.u32 %v90, 4294901760
    %2732 = vmatpush1.msra.mxu0 %v2731
    %2733 = vmatprep.subr.mxu0 0.0
    %v2734 = vand.u32 %v89, 4294901760
    %2735 = vmatpush1.msra.mxu0 %v2734
    %2736 = vmatprep.subr.mxu0 0.0
    %v2737 = vand.u32 %v88, 4294901760
    %2738 = vmatpush1.msra.mxu0 %v2737
    %2739 = vmatprep.subr.mxu0 0.0
    %v2740 = vand.u32 %v87, 4294901760
    %2741 = vmatpush1.msra.mxu0 %v2740
    %2742 = vmatprep.subr.mxu0 0.0
    %v2743 = vand.u32 %v86, 4294901760
    %2744 = vmatpush1.msra.mxu0 %v2743
    %2745 = vmatprep.subr.mxu0 0.0
    %v2746 = vand.u32 %v117, 4294901760
    %2747 = vmatpush2.msra.mxu0 %v2746
    %2748 = vmatprep.subr.mxu0 0.0
    %v2749 = vand.u32 %v116, 4294901760
    %2750 = vmatpush2.msra.mxu0 %v2749
    %2751 = vmatprep.subr.mxu0 0.0
    %v2752 = vand.u32 %v115, 4294901760
    %2753 = vmatpush2.msra.mxu0 %v2752
    %2754 = vmatprep.subr.mxu0 0.0
    %v2755 = vand.u32 %v114, 4294901760
    %2756 = vmatpush2.msra.mxu0 %v2755
    %2757 = vmatprep.subr.mxu0 0.0
    %v2758 = vand.u32 %v113, 4294901760
    %2759 = vmatpush2.msra.mxu0 %v2758
    %2760 = vmatprep.subr.mxu0 0.0
    %v2761 = vand.u32 %v112, 4294901760
    %2762 = vmatpush2.msra.mxu0 %v2761
    %2763 = vmatprep.subr.mxu0 0.0
    %v2764 = vand.u32 %v111, 4294901760
    %2765 = vmatpush2.msra.mxu0 %v2764
    %2766 = vmatprep.subr.mxu0 0.0
    %v2767 = vand.u32 %v110, 4294901760
    %2768 = vmatpush2.msra.mxu0 %v2767
    %2769 = vmatprep.subr.mxu0 0.0
    %v2770 = vand.u32 %v109, 4294901760
    %2771 = vmatpush2.msra.mxu0 %v2770
    %2772 = vmatprep.subr.mxu0 0.0
    %v2773 = vand.u32 %v108, 4294901760
    %2774 = vmatpush2.msra.mxu0 %v2773
    %2775 = vmatprep.subr.mxu0 0.0
    %v2776 = vand.u32 %v107, 4294901760
    %2777 = vmatpush2.msra.mxu0 %v2776
    %2778 = vmatprep.subr.mxu0 0.0
    %v2779 = vand.u32 %v106, 4294901760
    %2780 = vmatpush2.msra.mxu0 %v2779
    %2781 = vmatprep.subr.mxu0 0.0
    %v2782 = vand.u32 %v105, 4294901760
    %2783 = vmatpush2.msra.mxu0 %v2782
    %2784 = vmatprep.subr.mxu0 0.0
    %v2785 = vand.u32 %v104, 4294901760
    %2786 = vmatpush2.msra.mxu0 %v2785
    %2787 = vmatprep.subr.mxu0 0.0
    %v2788 = vand.u32 %v103, 4294901760
    %2789 = vmatpush2.msra.mxu0 %v2788
    %2790 = vmatprep.subr.mxu0 0.0
    %v2791 = vand.u32 %v102, 4294901760
    %2792 = vmatpush2.msra.mxu0 %v2791
    %v2793 = vand.u32 %v204, 4294901760
    %2794 = vmatprep.mubr.f32.mxu0 %v2793
    %v2795 = vand.u32 %v203, 4294901760
    %2796 = vmatmul.mubr.f32.gmra.mxu0 %v2795
    %v2797 = vpop.f32.mrf.mxu0
    %v2798 = vadd.f32 %v2694, %v2797
    %v2799 = vpop.f32.mrf.mxu0
    %2800 = vdwg.mxu0
    %2801 = vmatprep.subr.mxu0 0.0
    %2802 = vmatpush1.msra.mxu0 0.0
    %2803 = vmatprep.subr.mxu0 0.0
    %2804 = vmatpush1.msra.mxu0 0.0
    %2805 = vmatprep.subr.mxu0 0.0
    %2806 = vmatpush1.msra.mxu0 0.0
    %2807 = vmatprep.subr.mxu0 0.0
    %2808 = vmatpush1.msra.mxu0 0.0
    %2809 = vmatprep.subr.mxu0 0.0
    %2810 = vmatpush1.msra.mxu0 0.0
    %2811 = vmatprep.subr.mxu0 0.0
    %2812 = vmatpush1.msra.mxu0 0.0
    %2813 = vmatprep.subr.mxu0 0.0
    %2814 = vmatpush1.msra.mxu0 0.0
    %2815 = vmatprep.subr.mxu0 0.0
    %2816 = vmatpush1.msra.mxu0 0.0
    %2817 = vmatprep.subr.mxu0 0.0
    %2818 = vmatpush1.msra.mxu0 0.0
    %2819 = vmatprep.subr.mxu0 0.0
    %2820 = vmatpush1.msra.mxu0 0.0
    %2821 = vmatprep.subr.mxu0 0.0
    %2822 = vmatpush1.msra.mxu0 0.0
    %2823 = vmatprep.subr.mxu0 0.0
    %2824 = vmatpush1.msra.mxu0 0.0
    %2825 = vmatprep.subr.mxu0 0.0
    %2826 = vmatpush1.msra.mxu0 0.0
    %2827 = vmatprep.subr.mxu0 0.0
    %2828 = vmatpush1.msra.mxu0 0.0
    %2829 = vmatprep.subr.mxu0 0.0
    %v2830 = vand.u32 %v119, 4294901760
    %2831 = vmatpush1.msra.mxu0 %v2830
    %2832 = vmatprep.subr.mxu0 0.0
    %v2833 = vand.u32 %v118, 4294901760
    %2834 = vmatpush1.msra.mxu0 %v2833
    %2835 = vmatprep.subr.mxu0 0.0
    %2836 = vmatpush2.msra.mxu0 0.0
    %2837 = vmatprep.subr.mxu0 0.0
    %2838 = vmatpush2.msra.mxu0 0.0
    %2839 = vmatprep.subr.mxu0 0.0
    %2840 = vmatpush2.msra.mxu0 0.0
    %2841 = vmatprep.subr.mxu0 0.0
    %2842 = vmatpush2.msra.mxu0 0.0
    %2843 = vmatprep.subr.mxu0 0.0
    %2844 = vmatpush2.msra.mxu0 0.0
    %2845 = vmatprep.subr.mxu0 0.0
    %2846 = vmatpush2.msra.mxu0 0.0
    %2847 = vmatprep.subr.mxu0 0.0
    %2848 = vmatpush2.msra.mxu0 0.0
    %2849 = vmatprep.subr.mxu0 0.0
    %2850 = vmatpush2.msra.mxu0 0.0
    %2851 = vmatprep.subr.mxu0 0.0
    %2852 = vmatpush2.msra.mxu0 0.0
    %2853 = vmatprep.subr.mxu0 0.0
    %2854 = vmatpush2.msra.mxu0 0.0
    %2855 = vmatprep.subr.mxu0 0.0
    %2856 = vmatpush2.msra.mxu0 0.0
    %2857 = vmatprep.subr.mxu0 0.0
    %2858 = vmatpush2.msra.mxu0 0.0
    %2859 = vmatprep.subr.mxu0 0.0
    %2860 = vmatpush2.msra.mxu0 0.0
    %2861 = vmatprep.subr.mxu0 0.0
    %2862 = vmatpush2.msra.mxu0 0.0
    %2863 = vmatprep.subr.mxu0 0.0
    %2864 = vmatpush2.msra.mxu0 0.0
    %2865 = vmatprep.subr.mxu0 0.0
    %2866 = vmatpush2.msra.mxu0 0.0
    %2867 = vmatprep.mubr.f32.mxu0 0.0
    %v2868 = vand.u32 %v213, 4294901760
    %v2869 = vsub.f32 %v213, %v2868
    %v2870 = vand.u32 %v2869, 4294901760
    %v2871 = vsub.f32 %v2869, %v2870
    %v2872 = vand.u32 %v2871, 4294901760
    %2873 = vmatmul.mubr.f32.gmra.mxu0 %v2872
    %v2874 = vpop.f32.mrf.mxu0
    %v2875 = vadd.f32 %v2798, %v2874
    %v2876 = vpop.f32.mrf.mxu0
    %2877 = vdwg.mxu0
    %2878 = vmatprep.subr.mxu0 0.0
    %2879 = vmatpush1.msra.mxu0 0.0
    %2880 = vmatprep.subr.mxu0 0.0
    %2881 = vmatpush1.msra.mxu0 0.0
    %2882 = vmatprep.subr.mxu0 0.0
    %2883 = vmatpush1.msra.mxu0 0.0
    %2884 = vmatprep.subr.mxu0 0.0
    %2885 = vmatpush1.msra.mxu0 0.0
    %2886 = vmatprep.subr.mxu0 0.0
    %2887 = vmatpush1.msra.mxu0 0.0
    %2888 = vmatprep.subr.mxu0 0.0
    %2889 = vmatpush1.msra.mxu0 0.0
    %2890 = vmatprep.subr.mxu0 0.0
    %2891 = vmatpush1.msra.mxu0 0.0
    %2892 = vmatprep.subr.mxu0 0.0
    %2893 = vmatpush1.msra.mxu0 0.0
    %2894 = vmatprep.subr.mxu0 0.0
    %2895 = vmatpush1.msra.mxu0 0.0
    %2896 = vmatprep.subr.mxu0 0.0
    %2897 = vmatpush1.msra.mxu0 0.0
    %2898 = vmatprep.subr.mxu0 0.0
    %2899 = vmatpush1.msra.mxu0 0.0
    %2900 = vmatprep.subr.mxu0 0.0
    %2901 = vmatpush1.msra.mxu0 0.0
    %2902 = vmatprep.subr.mxu0 0.0
    %2903 = vmatpush1.msra.mxu0 0.0
    %2904 = vmatprep.subr.mxu0 0.0
    %2905 = vmatpush1.msra.mxu0 0.0
    %2906 = vmatprep.subr.mxu0 0.0
    %v2907 = vand.u32 %v119, 4294901760
    %v2908 = vsub.f32 %v119, %v2907
    %v2909 = vand.u32 %v2908, 4294901760
    %v2910 = vsub.f32 %v2908, %v2909
    %v2911 = vand.u32 %v2910, 4294901760
    %2912 = vmatpush1.msra.mxu0 %v2911
    %2913 = vmatprep.subr.mxu0 0.0
    %v2914 = vand.u32 %v118, 4294901760
    %v2915 = vsub.f32 %v118, %v2914
    %v2916 = vand.u32 %v2915, 4294901760
    %v2917 = vsub.f32 %v2915, %v2916
    %v2918 = vand.u32 %v2917, 4294901760
    %2919 = vmatpush1.msra.mxu0 %v2918
    %2920 = vmatprep.subr.mxu0 0.0
    %2921 = vmatpush2.msra.mxu0 0.0
    %2922 = vmatprep.subr.mxu0 0.0
    %2923 = vmatpush2.msra.mxu0 0.0
    %2924 = vmatprep.subr.mxu0 0.0
    %2925 = vmatpush2.msra.mxu0 0.0
    %2926 = vmatprep.subr.mxu0 0.0
    %2927 = vmatpush2.msra.mxu0 0.0
    %2928 = vmatprep.subr.mxu0 0.0
    %2929 = vmatpush2.msra.mxu0 0.0
    %2930 = vmatprep.subr.mxu0 0.0
    %2931 = vmatpush2.msra.mxu0 0.0
    %2932 = vmatprep.subr.mxu0 0.0
    %2933 = vmatpush2.msra.mxu0 0.0
    %2934 = vmatprep.subr.mxu0 0.0
    %2935 = vmatpush2.msra.mxu0 0.0
    %2936 = vmatprep.subr.mxu0 0.0
    %2937 = vmatpush2.msra.mxu0 0.0
    %2938 = vmatprep.subr.mxu0 0.0
    %2939 = vmatpush2.msra.mxu0 0.0
    %2940 = vmatprep.subr.mxu0 0.0
    %2941 = vmatpush2.msra.mxu0 0.0
    %2942 = vmatprep.subr.mxu0 0.0
    %2943 = vmatpush2.msra.mxu0 0.0
    %2944 = vmatprep.subr.mxu0 0.0
    %2945 = vmatpush2.msra.mxu0 0.0
    %2946 = vmatprep.subr.mxu0 0.0
    %2947 = vmatpush2.msra.mxu0 0.0
    %2948 = vmatprep.subr.mxu0 0.0
    %2949 = vmatpush2.msra.mxu0 0.0
    %2950 = vmatprep.subr.mxu0 0.0
    %2951 = vmatpush2.msra.mxu0 0.0
    %2952 = vmatprep.mubr.f32.mxu0 0.0
    %v2953 = vand.u32 %v213, 4294901760
    %2954 = vmatmul.mubr.f32.gmra.mxu0 %v2953
    %v2955 = vpop.f32.mrf.mxu0
    %v2956 = vadd.f32 %v2875, %v2955
    %v2957 = vpop.f32.mrf.mxu0
    %2958 = vdwg.mxu0
    %2959 = vmatprep.subr.mxu0 0.0
    %2960 = vmatpush1.msra.mxu0 0.0
    %2961 = vmatprep.subr.mxu0 0.0
    %2962 = vmatpush1.msra.mxu0 0.0
    %2963 = vmatprep.subr.mxu0 0.0
    %2964 = vmatpush1.msra.mxu0 0.0
    %2965 = vmatprep.subr.mxu0 0.0
    %2966 = vmatpush1.msra.mxu0 0.0
    %2967 = vmatprep.subr.mxu0 0.0
    %2968 = vmatpush1.msra.mxu0 0.0
    %2969 = vmatprep.subr.mxu0 0.0
    %2970 = vmatpush1.msra.mxu0 0.0
    %2971 = vmatprep.subr.mxu0 0.0
    %2972 = vmatpush1.msra.mxu0 0.0
    %2973 = vmatprep.subr.mxu0 0.0
    %2974 = vmatpush1.msra.mxu0 0.0
    %2975 = vmatprep.subr.mxu0 0.0
    %2976 = vmatpush1.msra.mxu0 0.0
    %2977 = vmatprep.subr.mxu0 0.0
    %2978 = vmatpush1.msra.mxu0 0.0
    %2979 = vmatprep.subr.mxu0 0.0
    %2980 = vmatpush1.msra.mxu0 0.0
    %2981 = vmatprep.subr.mxu0 0.0
    %2982 = vmatpush1.msra.mxu0 0.0
    %2983 = vmatprep.subr.mxu0 0.0
    %2984 = vmatpush1.msra.mxu0 0.0
    %2985 = vmatprep.subr.mxu0 0.0
    %2986 = vmatpush1.msra.mxu0 0.0
    %2987 = vmatprep.subr.mxu0 0.0
    %v2988 = vand.u32 %v119, 4294901760
    %v2989 = vsub.f32 %v119, %v2988
    %2990 = vmatpush1.msra.mxu0 %v2989
    %2991 = vmatprep.subr.mxu0 0.0
    %v2992 = vand.u32 %v118, 4294901760
    %v2993 = vsub.f32 %v118, %v2992
    %2994 = vmatpush1.msra.mxu0 %v2993
    %2995 = vmatprep.subr.mxu0 0.0
    %2996 = vmatpush2.msra.mxu0 0.0
    %2997 = vmatprep.subr.mxu0 0.0
    %2998 = vmatpush2.msra.mxu0 0.0
    %2999 = vmatprep.subr.mxu0 0.0
    %3000 = vmatpush2.msra.mxu0 0.0
    %3001 = vmatprep.subr.mxu0 0.0
    %3002 = vmatpush2.msra.mxu0 0.0
    %3003 = vmatprep.subr.mxu0 0.0
    %3004 = vmatpush2.msra.mxu0 0.0
    %3005 = vmatprep.subr.mxu0 0.0
    %3006 = vmatpush2.msra.mxu0 0.0
    %3007 = vmatprep.subr.mxu0 0.0
    %3008 = vmatpush2.msra.mxu0 0.0
    %3009 = vmatprep.subr.mxu0 0.0
    %3010 = vmatpush2.msra.mxu0 0.0
    %3011 = vmatprep.subr.mxu0 0.0
    %3012 = vmatpush2.msra.mxu0 0.0
    %3013 = vmatprep.subr.mxu0 0.0
    %3014 = vmatpush2.msra.mxu0 0.0
    %3015 = vmatprep.subr.mxu0 0.0
    %3016 = vmatpush2.msra.mxu0 0.0
    %3017 = vmatprep.subr.mxu0 0.0
    %3018 = vmatpush2.msra.mxu0 0.0
    %3019 = vmatprep.subr.mxu0 0.0
    %3020 = vmatpush2.msra.mxu0 0.0
    %3021 = vmatprep.subr.mxu0 0.0
    %3022 = vmatpush2.msra.mxu0 0.0
    %3023 = vmatprep.subr.mxu0 0.0
    %3024 = vmatpush2.msra.mxu0 0.0
    %3025 = vmatprep.subr.mxu0 0.0
    %3026 = vmatpush2.msra.mxu0 0.0
    %3027 = vmatprep.mubr.f32.mxu0 0.0
    %v3028 = vand.u32 %v213, 4294901760
    %v3029 = vsub.f32 %v213, %v3028
    %3030 = vmatmul.mubr.f32.gmra.mxu0 %v3029
    %v3031 = vpop.f32.mrf.mxu0
    %v3032 = vadd.f32 %v2956, %v3031
    %v3033 = vpop.f32.mrf.mxu0
    %3034 = vdwg.mxu0
    %3035 = vmatprep.subr.mxu0 0.0
    %3036 = vmatpush1.msra.mxu0 0.0
    %3037 = vmatprep.subr.mxu0 0.0
    %3038 = vmatpush1.msra.mxu0 0.0
    %3039 = vmatprep.subr.mxu0 0.0
    %3040 = vmatpush1.msra.mxu0 0.0
    %3041 = vmatprep.subr.mxu0 0.0
    %3042 = vmatpush1.msra.mxu0 0.0
    %3043 = vmatprep.subr.mxu0 0.0
    %3044 = vmatpush1.msra.mxu0 0.0
    %3045 = vmatprep.subr.mxu0 0.0
    %3046 = vmatpush1.msra.mxu0 0.0
    %3047 = vmatprep.subr.mxu0 0.0
    %3048 = vmatpush1.msra.mxu0 0.0
    %3049 = vmatprep.subr.mxu0 0.0
    %3050 = vmatpush1.msra.mxu0 0.0
    %3051 = vmatprep.subr.mxu0 0.0
    %3052 = vmatpush1.msra.mxu0 0.0
    %3053 = vmatprep.subr.mxu0 0.0
    %3054 = vmatpush1.msra.mxu0 0.0
    %3055 = vmatprep.subr.mxu0 0.0
    %3056 = vmatpush1.msra.mxu0 0.0
    %3057 = vmatprep.subr.mxu0 0.0
    %3058 = vmatpush1.msra.mxu0 0.0
    %3059 = vmatprep.subr.mxu0 0.0
    %3060 = vmatpush1.msra.mxu0 0.0
    %3061 = vmatprep.subr.mxu0 0.0
    %3062 = vmatpush1.msra.mxu0 0.0
    %3063 = vmatprep.subr.mxu0 0.0
    %v3064 = vand.u32 %v119, 4294901760
    %3065 = vmatpush1.msra.mxu0 %v3064
    %3066 = vmatprep.subr.mxu0 0.0
    %v3067 = vand.u32 %v118, 4294901760
    %3068 = vmatpush1.msra.mxu0 %v3067
    %3069 = vmatprep.subr.mxu0 0.0
    %3070 = vmatpush2.msra.mxu0 0.0
    %3071 = vmatprep.subr.mxu0 0.0
    %3072 = vmatpush2.msra.mxu0 0.0
    %3073 = vmatprep.subr.mxu0 0.0
    %3074 = vmatpush2.msra.mxu0 0.0
    %3075 = vmatprep.subr.mxu0 0.0
    %3076 = vmatpush2.msra.mxu0 0.0
    %3077 = vmatprep.subr.mxu0 0.0
    %3078 = vmatpush2.msra.mxu0 0.0
    %3079 = vmatprep.subr.mxu0 0.0
    %3080 = vmatpush2.msra.mxu0 0.0
    %3081 = vmatprep.subr.mxu0 0.0
    %3082 = vmatpush2.msra.mxu0 0.0
    %3083 = vmatprep.subr.mxu0 0.0
    %3084 = vmatpush2.msra.mxu0 0.0
    %3085 = vmatprep.subr.mxu0 0.0
    %3086 = vmatpush2.msra.mxu0 0.0
    %3087 = vmatprep.subr.mxu0 0.0
    %3088 = vmatpush2.msra.mxu0 0.0
    %3089 = vmatprep.subr.mxu0 0.0
    %3090 = vmatpush2.msra.mxu0 0.0
    %3091 = vmatprep.subr.mxu0 0.0
    %3092 = vmatpush2.msra.mxu0 0.0
    %3093 = vmatprep.subr.mxu0 0.0
    %3094 = vmatpush2.msra.mxu0 0.0
    %3095 = vmatprep.subr.mxu0 0.0
    %3096 = vmatpush2.msra.mxu0 0.0
    %3097 = vmatprep.subr.mxu0 0.0
    %3098 = vmatpush2.msra.mxu0 0.0
    %3099 = vmatprep.subr.mxu0 0.0
    %3100 = vmatpush2.msra.mxu0 0.0
    %3101 = vmatprep.mubr.f32.mxu0 0.0
    %v3102 = vand.u32 %v213, 4294901760
    %v3103 = vsub.f32 %v213, %v3102
    %v3104 = vand.u32 %v3103, 4294901760
    %3105 = vmatmul.mubr.f32.gmra.mxu0 %v3104
    %v3106 = vpop.f32.mrf.mxu0
    %v3107 = vadd.f32 %v3032, %v3106
    %v3108 = vpop.f32.mrf.mxu0
    %3109 = vdwg.mxu0
    %3110 = vmatprep.subr.mxu0 0.0
    %3111 = vmatpush1.msra.mxu0 0.0
    %3112 = vmatprep.subr.mxu0 0.0
    %3113 = vmatpush1.msra.mxu0 0.0
    %3114 = vmatprep.subr.mxu0 0.0
    %3115 = vmatpush1.msra.mxu0 0.0
    %3116 = vmatprep.subr.mxu0 0.0
    %3117 = vmatpush1.msra.mxu0 0.0
    %3118 = vmatprep.subr.mxu0 0.0
    %3119 = vmatpush1.msra.mxu0 0.0
    %3120 = vmatprep.subr.mxu0 0.0
    %3121 = vmatpush1.msra.mxu0 0.0
    %3122 = vmatprep.subr.mxu0 0.0
    %3123 = vmatpush1.msra.mxu0 0.0
    %3124 = vmatprep.subr.mxu0 0.0
    %3125 = vmatpush1.msra.mxu0 0.0
    %3126 = vmatprep.subr.mxu0 0.0
    %3127 = vmatpush1.msra.mxu0 0.0
    %3128 = vmatprep.subr.mxu0 0.0
    %3129 = vmatpush1.msra.mxu0 0.0
    %3130 = vmatprep.subr.mxu0 0.0
    %3131 = vmatpush1.msra.mxu0 0.0
    %3132 = vmatprep.subr.mxu0 0.0
    %3133 = vmatpush1.msra.mxu0 0.0
    %3134 = vmatprep.subr.mxu0 0.0
    %3135 = vmatpush1.msra.mxu0 0.0
    %3136 = vmatprep.subr.mxu0 0.0
    %3137 = vmatpush1.msra.mxu0 0.0
    %3138 = vmatprep.subr.mxu0 0.0
    %v3139 = vand.u32 %v119, 4294901760
    %v3140 = vsub.f32 %v119, %v3139
    %v3141 = vand.u32 %v3140, 4294901760
    %3142 = vmatpush1.msra.mxu0 %v3141
    %3143 = vmatprep.subr.mxu0 0.0
    %v3144 = vand.u32 %v118, 4294901760
    %v3145 = vsub.f32 %v118, %v3144
    %v3146 = vand.u32 %v3145, 4294901760
    %3147 = vmatpush1.msra.mxu0 %v3146
    %3148 = vmatprep.subr.mxu0 0.0
    %3149 = vmatpush2.msra.mxu0 0.0
    %3150 = vmatprep.subr.mxu0 0.0
    %3151 = vmatpush2.msra.mxu0 0.0
    %3152 = vmatprep.subr.mxu0 0.0
    %3153 = vmatpush2.msra.mxu0 0.0
    %3154 = vmatprep.subr.mxu0 0.0
    %3155 = vmatpush2.msra.mxu0 0.0
    %3156 = vmatprep.subr.mxu0 0.0
    %3157 = vmatpush2.msra.mxu0 0.0
    %3158 = vmatprep.subr.mxu0 0.0
    %3159 = vmatpush2.msra.mxu0 0.0
    %3160 = vmatprep.subr.mxu0 0.0
    %3161 = vmatpush2.msra.mxu0 0.0
    %3162 = vmatprep.subr.mxu0 0.0
    %3163 = vmatpush2.msra.mxu0 0.0
    %3164 = vmatprep.subr.mxu0 0.0
    %3165 = vmatpush2.msra.mxu0 0.0
    %3166 = vmatprep.subr.mxu0 0.0
    %3167 = vmatpush2.msra.mxu0 0.0
    %3168 = vmatprep.subr.mxu0 0.0
    %3169 = vmatpush2.msra.mxu0 0.0
    %3170 = vmatprep.subr.mxu0 0.0
    %3171 = vmatpush2.msra.mxu0 0.0
    %3172 = vmatprep.subr.mxu0 0.0
    %3173 = vmatpush2.msra.mxu0 0.0
    %3174 = vmatprep.subr.mxu0 0.0
    %3175 = vmatpush2.msra.mxu0 0.0
    %3176 = vmatprep.subr.mxu0 0.0
    %3177 = vmatpush2.msra.mxu0 0.0
    %3178 = vmatprep.subr.mxu0 0.0
    %3179 = vmatpush2.msra.mxu0 0.0
    %3180 = vmatprep.mubr.f32.mxu0 0.0
    %v3181 = vand.u32 %v213, 4294901760
    %3182 = vmatmul.mubr.f32.gmra.mxu0 %v3181
    %v3183 = vpop.f32.mrf.mxu0
    %v3184 = vadd.f32 %v3107, %v3183
    %v3185 = vpop.f32.mrf.mxu0
    %3186 = vdwg.mxu0
    %3187 = vmatprep.subr.mxu0 0.0
    %3188 = vmatpush1.msra.mxu0 0.0
    %3189 = vmatprep.subr.mxu0 0.0
    %3190 = vmatpush1.msra.mxu0 0.0
    %3191 = vmatprep.subr.mxu0 0.0
    %3192 = vmatpush1.msra.mxu0 0.0
    %3193 = vmatprep.subr.mxu0 0.0
    %3194 = vmatpush1.msra.mxu0 0.0
    %3195 = vmatprep.subr.mxu0 0.0
    %3196 = vmatpush1.msra.mxu0 0.0
    %3197 = vmatprep.subr.mxu0 0.0
    %3198 = vmatpush1.msra.mxu0 0.0
    %3199 = vmatprep.subr.mxu0 0.0
    %3200 = vmatpush1.msra.mxu0 0.0
    %3201 = vmatprep.subr.mxu0 0.0
    %3202 = vmatpush1.msra.mxu0 0.0
    %3203 = vmatprep.subr.mxu0 0.0
    %3204 = vmatpush1.msra.mxu0 0.0
    %3205 = vmatprep.subr.mxu0 0.0
    %3206 = vmatpush1.msra.mxu0 0.0
    %3207 = vmatprep.subr.mxu0 0.0
    %3208 = vmatpush1.msra.mxu0 0.0
    %3209 = vmatprep.subr.mxu0 0.0
    %3210 = vmatpush1.msra.mxu0 0.0
    %3211 = vmatprep.subr.mxu0 0.0
    %3212 = vmatpush1.msra.mxu0 0.0
    %3213 = vmatprep.subr.mxu0 0.0
    %3214 = vmatpush1.msra.mxu0 0.0
    %3215 = vmatprep.subr.mxu0 0.0
    %v3216 = vand.u32 %v119, 4294901760
    %3217 = vmatpush1.msra.mxu0 %v3216
    %3218 = vmatprep.subr.mxu0 0.0
    %v3219 = vand.u32 %v118, 4294901760
    %3220 = vmatpush1.msra.mxu0 %v3219
    %3221 = vmatprep.subr.mxu0 0.0
    %3222 = vmatpush2.msra.mxu0 0.0
    %3223 = vmatprep.subr.mxu0 0.0
    %3224 = vmatpush2.msra.mxu0 0.0
    %3225 = vmatprep.subr.mxu0 0.0
    %3226 = vmatpush2.msra.mxu0 0.0
    %3227 = vmatprep.subr.mxu0 0.0
    %3228 = vmatpush2.msra.mxu0 0.0
    %3229 = vmatprep.subr.mxu0 0.0
    %3230 = vmatpush2.msra.mxu0 0.0
    %3231 = vmatprep.subr.mxu0 0.0
    %3232 = vmatpush2.msra.mxu0 0.0
    %3233 = vmatprep.subr.mxu0 0.0
    %3234 = vmatpush2.msra.mxu0 0.0
    %3235 = vmatprep.subr.mxu0 0.0
    %3236 = vmatpush2.msra.mxu0 0.0
    %3237 = vmatprep.subr.mxu0 0.0
    %3238 = vmatpush2.msra.mxu0 0.0
    %3239 = vmatprep.subr.mxu0 0.0
    %3240 = vmatpush2.msra.mxu0 0.0
    %3241 = vmatprep.subr.mxu0 0.0
    %3242 = vmatpush2.msra.mxu0 0.0
    %3243 = vmatprep.subr.mxu0 0.0
    %3244 = vmatpush2.msra.mxu0 0.0
    %3245 = vmatprep.subr.mxu0 0.0
    %3246 = vmatpush2.msra.mxu0 0.0
    %3247 = vmatprep.subr.mxu0 0.0
    %3248 = vmatpush2.msra.mxu0 0.0
    %3249 = vmatprep.subr.mxu0 0.0
    %3250 = vmatpush2.msra.mxu0 0.0
    %3251 = vmatprep.subr.mxu0 0.0
    %3252 = vmatpush2.msra.mxu0 0.0
    %3253 = vmatprep.mubr.f32.mxu0 0.0
    %v3254 = vand.u32 %v213, 4294901760
    %3255 = vmatmul.mubr.f32.gmra.mxu0 %v3254
    %v3256 = vpop.f32.mrf.mxu0
    %v3257 = vadd.f32 %v3184, %v3256
    %v3258 = vpop.f32.mrf.mxu0
    %3259 = vdwg.mxu0
    %vm3260 = vcmask 80896
    %3261 = vst.msk [vmem:[#allocation2] sm:$0xff] %vm3260, %v3257
    // Predicated region
    $region14: #{fnn1_forward.1} parent=1 // pred_check
      _
    $region15: #{fnn1_forward.1} parent=1 // pred_check_branch
      %3263 = sbr.rel (0) target = $region17
    $region16: #{fnn1_forward.1} parent=1 // pred_region
      // Predicated region
      $region18: #{fnn1_forward.1} parent=16 // pred_check
        _
      $region19: #{fnn1_forward.1} parent=16 // pred_check_branch
        %3265 = sbr.rel (0) target = $region21
      $region20: #{fnn1_forward.1} parent=16 // pred_region
        // Predicated region
        $region22: #{fnn1_forward.1} parent=20 // pred_check
          _
        $region23: #{fnn1_forward.1} parent=20 // pred_check_branch
          %3267 = sbr.rel target = $region25
        $region24: #{fnn1_forward.1} parent=20 // pred_region
          // Predicated region
          $region37: #{fnn1_forward.1} parent=24 // pred_check
            _
          $region38: #{fnn1_forward.1} parent=24 // pred_check_branch
            %3283 = sbr.rel (0) target = $region40
          $region39: #{fnn1_forward.1} parent=24 // pred_region
            %s3285 = ssub.s32 4, 1
            loop: start=0, step=1, limit=1
            $region41: #{fnn1_forward.1} parent=39 // loop_pre_header
              _
            $region42: #{fnn1_forward.1} parent=39 // loop_header
              %s3287 = sphi 0, %s3291
              %p3288 = scmp.ge.s32.totalorder %s3287, 1
              %s3292 = sphi [#allocation2], [#allocation2]
              %s3293 = sphi %s3, %s3
            $region43: #{fnn1_forward.1} parent=39 // loop_header_branch
              %3290 = sbr.rel (%p3288) target = $region47
            $region44: #{fnn1_forward.1} parent=39 // loop_body
              %v3294 = vld [vmem:[%s3292] sm:%s3285]
              %3295 = vst [vmem:[%s3293] sm:%s3285] %v3294
            $region45: #{fnn1_forward.1} parent=39 // loop_footer
              %s3291 = sadd.s32 1, %s3287
            $region46: #{fnn1_forward.1} parent=39 // loop_footer_branch
              %3286 = sbr.rel target = $region42
            $region47: #{fnn1_forward.1} parent=39 // loop_exit
              _
          $region40: #{fnn1_forward.1} parent=24 // pred_fallthru
            _
        $region25: #{fnn1_forward.1} parent=20 // pred_fallthru
          _
        // Predicated region
        $region26: #{fnn1_forward.1} parent=20 // pred_check
          _
        $region27: #{fnn1_forward.1} parent=20 // pred_check_branch
          %3269 = sbr.rel (0) target = $region29
        $region28: #{fnn1_forward.1} parent=20 // pred_region
          %s3271 = ssub.s32 4, 1
          loop: start=0, step=1, limit=1
          $region30: #{fnn1_forward.1} parent=28 // loop_pre_header
            _
          $region31: #{fnn1_forward.1} parent=28 // loop_header
            %s3273 = sphi 0, %s3277
            %p3274 = scmp.ge.s32.totalorder %s3273, 1
            %s3278 = sphi [#allocation2], [#allocation2]
            %s3279 = sphi %s3, %s3
          $region32: #{fnn1_forward.1} parent=28 // loop_header_branch
            %3276 = sbr.rel (%p3274) target = $region36
          $region33: #{fnn1_forward.1} parent=28 // loop_body
            %v3280 = vld [vmem:[%s3278] sm:%s3271]
            %3281 = vst [vmem:[%s3279] sm:%s3271] %v3280
          $region34: #{fnn1_forward.1} parent=28 // loop_footer
            %s3277 = sadd.s32 1, %s3273
          $region35: #{fnn1_forward.1} parent=28 // loop_footer_branch
            %3272 = sbr.rel target = $region31
          $region36: #{fnn1_forward.1} parent=28 // loop_exit
            _
        $region29: #{fnn1_forward.1} parent=20 // pred_fallthru
          _
      $region21: #{fnn1_forward.1} parent=16 // pred_fallthru
        _
      %3296 = vnop
    $region17: #{fnn1_forward.1} parent=1 // pred_fallthru
      _
    // Predicated region
    $region48: #{fnn1_forward.1} parent=1 // pred_check
      _
    $region49: #{fnn1_forward.1} parent=1 // pred_check_branch
      %3298 = sbr.rel (0) target = $region51
    $region50: #{fnn1_forward.1} parent=1 // pred_region
      _
    $region51: #{fnn1_forward.1} parent=1 // pred_fallthru
      _

</llo_original>
